<compile_context>
chip_gen: v7x
topology: tpu7x:2x2x1
jax: 0.10.0
libtpu: 0.0.40
codegen_flags: <defaults>
</compile_context>

<pallas_src>
import functools

import jax
import jax.numpy as jnp
from jax import lax
from jax.experimental import pallas as pl
from jax.experimental.pallas import tpu as pltpu
import numpy as np


def _round_up(x, m):
    return (x + m - 1) // m * m


def _conv_block1d_kernel(x1_ref, w1_ref, b1_ref, w2_ref, b2_ref, sel_ref, o_ref,
                         *, N, L1P, GR, L2P, K, C1, neg_slope):
    """Fused ConvBlock1D, whole (small) batch in one invocation.

    x1_ref : (N*L1P, K*Cin)  batch-stacked layer-1 im2col (rows >= Lout1 zero-padded)
    w1_ref : (K*Cin, C1)     layer-1 weight, (k, ci) row order
    b1_ref : (1, C1)
    w2_ref : (K*C1, C2)      layer-2 weight, (k, ci) row order
    b2_ref : (1, C2)
    sel_ref: (L2P, GR)       one-hot row selection (stride subsample + zero pad rows)
    o_ref  : (N*L2P, C2)
    """
    C2 = o_ref.shape[-1]

    # ----- layer 1: ONE fat MXU matmul over the whole stacked batch -------------
    h1 = jnp.dot(x1_ref[...], w1_ref[...],
                 preferred_element_type=jnp.float32)            # (N*L1P, C1)
    h1 = h1 + b1_ref[...]
    h1 = jnp.where(h1 > 0, h1, neg_slope * h1)

    n_chunks = K // 8

    # ----- layer 2: per-batch build (keeps rolled-copy working set small) -------
    for n in range(N):                                           # static python loop
        h1n = h1[n * L1P:(n + 1) * L1P, :]                       # 8-aligned static slice

        # Lane-paired tile: hp[m, :C1] = h1n[m], hp[m, C1:] = h1n[m + 1].
        # One sublane roll + one lane concat -> 128-lane-dense pieces from here on.
        hp = jnp.concatenate(
            [h1n, pltpu.roll(h1n, shift=L1P - 1, axis=0)], axis=1)   # (L1P, 2*C1)

        # Rolled copies only for sublane shifts 2/4/6 (shift 0 = hp itself).
        # Any tap shift 2j decomposes as 8*q + r with r in {0,2,4,6}; the 8*q part
        # is an 8-aligned static slice (pure vreg re-selection, no XLU work).
        rolled = [hp if r == 0 else pltpu.roll(hp, shift=(L1P - r) % L1P, axis=0)
                  for r in (0, 2, 4, 6)]

        # Chunked accumulation: 8 taps (= 4 lane pairs) per MXU matmul, so the
        # full (GR, K*C1) im2col is never materialized.
        acc = jnp.zeros((GR, C2), jnp.float32)
        for q in range(n_chunks):
            chunk = jnp.concatenate(
                [rolled[p][8 * q: 8 * q + GR, :] for p in range(4)],
                axis=1)                                          # (GR, 8*C1)
            acc = acc + jnp.dot(chunk,
                                w2_ref[8 * q * C1:(8 * q + 8) * C1, :],
                                preferred_element_type=jnp.float32)

        g = acc + b2_ref[...]
        g = jnp.where(g > 0, g, neg_slope * g)

        # Stride-2 subsample + drop padded rows via one-hot selection matmul;
        # stored tile has a multiple-of-8 row count.
        o_ref[n * L2P:(n + 1) * L2P, :] = jnp.dot(
            sel_ref[...], g, preferred_element_type=jnp.float32).astype(o_ref.dtype)


def conv_block_1d(x, params, *, stride=2, neg_slope=0.01):
    """x: (N, L, Cin) channel-last.  Returns (N, Lout2, Cout)."""
    w1, b1, w2, b2 = params
    N, L, Cin = x.shape
    K, Cin_w, C1 = w1.shape
    assert Cin_w == Cin
    K2, C1_w, C2 = w2.shape
    assert K2 == K and C1_w == C1
    assert K % 8 == 0, "chunked layer-2 accumulation assumes K is a multiple of 8"

    Lout1 = (L - K) // stride + 1
    Lout2 = (Lout1 - K) // stride + 1
    assert Lout1 >= 1 and Lout2 >= 1
    # Reviewer-requested invariant: every selected stride-1 row of the layer-2
    # result only reads VALID layer-1 rows (bias-contaminated padded h1 rows can
    # only leak into rows that sel zeroes out).
    assert stride * (Lout2 - 1) + (K - 1) <= Lout1 - 1

    GR = _round_up(stride * (Lout2 - 1) + 1, 8)     # stride-1 layer-2 rows actually built
    L1P = _round_up(max(Lout1, GR + K - 1), 8)      # padded layer-1 rows (per batch)
    L2P = _round_up(Lout2, 8)                       # padded output rows (per batch)

    # Layer-1 im2col on the wrapper side (tiny: N*Lout1*K*Cin elements), then
    # batch-stacked so the whole problem is a single grid step.
    # x1[n, l, k*Cin + ci] = x[n, stride*l + k, ci]
    cols = [x[:, k: k + stride * Lout1: stride, :] for k in range(K)]
    x1 = jnp.concatenate(cols, axis=-1)                          # (N, Lout1, K*Cin)
    x1 = jnp.pad(x1, ((0, 0), (0, L1P - Lout1), (0, 0)))
    x1s = x1.reshape(N * L1P, K * Cin)

    w1f = w1.reshape(K * Cin, C1)                                # (k, ci) row-major
    w2f = w2.reshape(K * C1, C2)
    b1r = b1.reshape(1, C1)
    b2r = b2.reshape(1, C2)

    # One-hot selection: row l picks stride-1 row stride*l for l < Lout2, else zeros.
    rows = jnp.arange(L2P)[:, None]
    sel = ((jnp.arange(GR)[None, :] == stride * rows) & (rows < Lout2)
           ).astype(jnp.float32)

    kernel = functools.partial(_conv_block1d_kernel, N=N, L1P=L1P, GR=GR, L2P=L2P,
                               K=K, C1=C1, neg_slope=neg_slope)

    out = pl.pallas_call(
        kernel,
        out_shape=jax.ShapeDtypeStruct((N * L2P, C2), x.dtype),
        grid=(1,),
        in_specs=[
            pl.BlockSpec((N * L1P, K * Cin), lambda i: (0, 0)),
            pl.BlockSpec((K * Cin, C1), lambda i: (0, 0)),
            pl.BlockSpec((1, C1), lambda i: (0, 0)),
            pl.BlockSpec((K * C1, C2), lambda i: (0, 0)),
            pl.BlockSpec((1, C2), lambda i: (0, 0)),
            pl.BlockSpec((L2P, GR), lambda i: (0, 0)),
        ],
        out_specs=pl.BlockSpec((N * L2P, C2), lambda i: (0, 0)),
        compiler_params=pltpu.CompilerParams(dimension_semantics=("arbitrary",)),
    )(x1s, w1f, b1r, w2f, b2r, sel)

    return out.reshape(N, L2P, C2)[:, :Lout2, :]


def conv_block_1d_reference(x, params, *, stride=2):
    """Plain-JAX reference (same math as torch Conv1d + LeakyReLU), NLC layout."""
    w1, b1, w2, b2 = params

    def layer(xx, w, b):
        y = lax.conv_general_dilated(
            xx, w, window_strides=(stride,), padding="VALID",
            dimension_numbers=("NWC", "WIO", "NWC"))
        y = y + b[None, None, :]
        return jnp.where(y > 0, y, 0.01 * y)

    return layer(layer(x, w1, b1), w2, b2)


if __name__ == "__main__":
    # Module hyperparameters (ConvBlock1D defaults).
    Cin, Cout, K, stride = 1, 64, 32, 2
    N, L = 2, 128

    key = jax.random.PRNGKey(0)
    kx, kw1, kb1, kw2, kb2 = jax.random.split(key, 5)

    # x is (N, L, Cin) channel-last; PyTorch equivalent would be x.transpose(1, 2).
    x = jax.random.normal(kx, (N, L, Cin), dtype=jnp.float32)

    # Weight layout (K, Cin, Cout), i.e. torch (Cout, Cin, K) transposed.
    w1 = 0.05 * jax.random.normal(kw1, (K, Cin, Cout), dtype=jnp.float32)
    b1 = 0.05 * jax.random.normal(kb1, (Cout,), dtype=jnp.float32)
    w2 = 0.05 * jax.random.normal(kw2, (K, Cout, Cout), dtype=jnp.float32)
    b2 = 0.05 * jax.random.normal(kb2, (Cout,), dtype=jnp.float32)
    params = (w1, b1, w2, b2)

    out = jax.block_until_ready(conv_block_1d(x, params, stride=stride))
    ref = jax.block_until_ready(conv_block_1d_reference(x, params, stride=stride))

    expected_L1 = (L - K) // stride + 1            # 49
    expected_L2 = (expected_L1 - K) // stride + 1  # 9
    assert out.shape == (N, expected_L2, Cout), out.shape
    np.testing.assert_allclose(np.asarray(out), np.asarray(ref), rtol=1e-3, atol=1e-3)

    print("KERNEL_OK")
</pallas_src>

<mosaic_0001>
module attributes {stable_mosaic.version = 11 : i64} {
  func.func @_conv_block1d_kernel(%arg0: i32, %arg1: memref<112x32xf32, #tpu.memory_space<vmem>>, %arg2: memref<32x64xf32, #tpu.memory_space<vmem>>, %arg3: memref<1x64xf32, #tpu.memory_space<vmem>>, %arg4: memref<2048x64xf32, #tpu.memory_space<vmem>>, %arg5: memref<1x64xf32, #tpu.memory_space<vmem>>, %arg6: memref<16x24xf32, #tpu.memory_space<vmem>>, %arg7: memref<32x64xf32, #tpu.memory_space<vmem>>) attributes {dimension_semantics = [#tpu.dimension_semantics<arbitrary>], iteration_bounds = array<i64: 1>, scalar_prefetch = 0 : i64, scratch_operands = 0 : i64, tpu.core_type = #tpu.core_type<tc>, window_params = [{pipeline_mode = #tpu.pipeline_mode<synchronous>, transform_indices = @transform_0, window_bounds = array<i64: 112, 32>}, {pipeline_mode = #tpu.pipeline_mode<synchronous>, transform_indices = @transform_1, window_bounds = array<i64: 32, 64>}, {pipeline_mode = #tpu.pipeline_mode<synchronous>, transform_indices = @transform_2, window_bounds = array<i64: 1, 64>}, {pipeline_mode = #tpu.pipeline_mode<synchronous>, transform_indices = @transform_3, window_bounds = array<i64: 2048, 64>}, {pipeline_mode = #tpu.pipeline_mode<synchronous>, transform_indices = @transform_4, window_bounds = array<i64: 1, 64>}, {pipeline_mode = #tpu.pipeline_mode<synchronous>, transform_indices = @transform_5, window_bounds = array<i64: 16, 24>}, {pipeline_mode = #tpu.pipeline_mode<synchronous>, transform_indices = @transform_6, window_bounds = array<i64: 32, 64>}]} {
    %c0 = arith.constant 0 : index
    %c0_0 = arith.constant 0 : index
    %0 = vector.load %arg1[%c0, %c0_0] : memref<112x32xf32, #tpu.memory_space<vmem>>, vector<112x32xf32>
    %c0_1 = arith.constant 0 : index
    %c0_2 = arith.constant 0 : index
    %1 = vector.load %arg2[%c0_1, %c0_2] : memref<32x64xf32, #tpu.memory_space<vmem>>, vector<32x64xf32>
    %cst = arith.constant dense<0.000000e+00> : vector<112x64xf32>
    %2 = tpu.matmul %0, %1, %cst {dimension_numbers = #tpu.dot_dimension_numbers<[1], [0], [0], [1], [0, 0, 1, 1], [], []>} : vector<112x32xf32>, vector<32x64xf32>, vector<112x64xf32> -> vector<112x64xf32>
    %c0_3 = arith.constant 0 : index
    %c0_4 = arith.constant 0 : index
    %3 = vector.load %arg3[%c0_3, %c0_4] : memref<1x64xf32, #tpu.memory_space<vmem>>, vector<1x64xf32>
    %4 = vector.broadcast %3 : vector<1x64xf32> to vector<112x64xf32>
    %5 = arith.addf %2, %4 : vector<112x64xf32>
    %cst_5 = arith.constant 0.000000e+00 : f32
    %6 = vector.broadcast %cst_5 : f32 to vector<112x64xf32>
    %7 = arith.cmpf ogt, %5, %6 : vector<112x64xf32>
    %cst_6 = arith.constant 0.00999999977 : f32
    %8 = vector.broadcast %cst_6 : f32 to vector<112x64xf32>
    %9 = arith.mulf %8, %5 : vector<112x64xf32>
    %10 = arith.select %7, %5, %9 : vector<112x64xi1>, vector<112x64xf32>
    %11 = vector.extract_strided_slice %10 {offsets = [0, 0], sizes = [56, 64], strides = [1, 1]} : vector<112x64xf32> to vector<56x64xf32>
    %c55_i32 = arith.constant 55 : i32
    %12 = tpu.dynamic_rotate %11 by %c55_i32 dim 0 : vector<56x64xf32>, i32 -> vector<56x64xf32>
    %13 = tpu.concatenate %11, %12 in 1 : vector<56x64xf32>, vector<56x64xf32> -> vector<56x128xf32>
    %c54_i32 = arith.constant 54 : i32
    %14 = tpu.dynamic_rotate %13 by %c54_i32 dim 0 : vector<56x128xf32>, i32 -> vector<56x128xf32>
    %c52_i32 = arith.constant 52 : i32
    %15 = tpu.dynamic_rotate %13 by %c52_i32 dim 0 : vector<56x128xf32>, i32 -> vector<56x128xf32>
    %c50_i32 = arith.constant 50 : i32
    %16 = tpu.dynamic_rotate %13 by %c50_i32 dim 0 : vector<56x128xf32>, i32 -> vector<56x128xf32>
    %cst_7 = arith.constant 0.000000e+00 : f32
    %17 = vector.broadcast %cst_7 : f32 to vector<24x64xf32>
    %18 = vector.extract_strided_slice %13 {offsets = [0, 0], sizes = [24, 128], strides = [1, 1]} : vector<56x128xf32> to vector<24x128xf32>
    %19 = vector.extract_strided_slice %14 {offsets = [0, 0], sizes = [24, 128], strides = [1, 1]} : vector<56x128xf32> to vector<24x128xf32>
    %20 = vector.extract_strided_slice %15 {offsets = [0, 0], sizes = [24, 128], strides = [1, 1]} : vector<56x128xf32> to vector<24x128xf32>
    %21 = vector.extract_strided_slice %16 {offsets = [0, 0], sizes = [24, 128], strides = [1, 1]} : vector<56x128xf32> to vector<24x128xf32>
    %22 = tpu.concatenate %18, %19, %20, %21 in 1 : vector<24x128xf32>, vector<24x128xf32>, vector<24x128xf32>, vector<24x128xf32> -> vector<24x512xf32>
    %c0_8 = arith.constant 0 : index
    %c0_9 = arith.constant 0 : index
    %23 = vector.load %arg4[%c0_8, %c0_9] : memref<2048x64xf32, #tpu.memory_space<vmem>>, vector<512x64xf32>
    %cst_10 = arith.constant dense<0.000000e+00> : vector<24x64xf32>
    %24 = tpu.matmul %22, %23, %cst_10 {dimension_numbers = #tpu.dot_dimension_numbers<[1], [0], [0], [1], [0, 0, 1, 1], [], []>} : vector<24x512xf32>, vector<512x64xf32>, vector<24x64xf32> -> vector<24x64xf32>
    %25 = arith.addf %17, %24 : vector<24x64xf32>
    %26 = vector.extract_strided_slice %13 {offsets = [8, 0], sizes = [24, 128], strides = [1, 1]} : vector<56x128xf32> to vector<24x128xf32>
    %27 = vector.extract_strided_slice %14 {offsets = [8, 0], sizes = [24, 128], strides = [1, 1]} : vector<56x128xf32> to vector<24x128xf32>
    %28 = vector.extract_strided_slice %15 {offsets = [8, 0], sizes = [24, 128], strides = [1, 1]} : vector<56x128xf32> to vector<24x128xf32>
    %29 = vector.extract_strided_slice %16 {offsets = [8, 0], sizes = [24, 128], strides = [1, 1]} : vector<56x128xf32> to vector<24x128xf32>
    %30 = tpu.concatenate %26, %27, %28, %29 in 1 : vector<24x128xf32>, vector<24x128xf32>, vector<24x128xf32>, vector<24x128xf32> -> vector<24x512xf32>
    %c512 = arith.constant 512 : index
    %c0_11 = arith.constant 0 : index
    %31 = vector.load %arg4[%c512, %c0_11] : memref<2048x64xf32, #tpu.memory_space<vmem>>, vector<512x64xf32>
    %cst_12 = arith.constant dense<0.000000e+00> : vector<24x64xf32>
    %32 = tpu.matmul %30, %31, %cst_12 {dimension_numbers = #tpu.dot_dimension_numbers<[1], [0], [0], [1], [0, 0, 1, 1], [], []>} : vector<24x512xf32>, vector<512x64xf32>, vector<24x64xf32> -> vector<24x64xf32>
    %33 = arith.addf %25, %32 : vector<24x64xf32>
    %34 = vector.extract_strided_slice %13 {offsets = [16, 0], sizes = [24, 128], strides = [1, 1]} : vector<56x128xf32> to vector<24x128xf32>
    %35 = vector.extract_strided_slice %14 {offsets = [16, 0], sizes = [24, 128], strides = [1, 1]} : vector<56x128xf32> to vector<24x128xf32>
    %36 = vector.extract_strided_slice %15 {offsets = [16, 0], sizes = [24, 128], strides = [1, 1]} : vector<56x128xf32> to vector<24x128xf32>
    %37 = vector.extract_strided_slice %16 {offsets = [16, 0], sizes = [24, 128], strides = [1, 1]} : vector<56x128xf32> to vector<24x128xf32>
    %38 = tpu.concatenate %34, %35, %36, %37 in 1 : vector<24x128xf32>, vector<24x128xf32>, vector<24x128xf32>, vector<24x128xf32> -> vector<24x512xf32>
    %c1024 = arith.constant 1024 : index
    %c0_13 = arith.constant 0 : index
    %39 = vector.load %arg4[%c1024, %c0_13] : memref<2048x64xf32, #tpu.memory_space<vmem>>, vector<512x64xf32>
    %cst_14 = arith.constant dense<0.000000e+00> : vector<24x64xf32>
    %40 = tpu.matmul %38, %39, %cst_14 {dimension_numbers = #tpu.dot_dimension_numbers<[1], [0], [0], [1], [0, 0, 1, 1], [], []>} : vector<24x512xf32>, vector<512x64xf32>, vector<24x64xf32> -> vector<24x64xf32>
    %41 = arith.addf %33, %40 : vector<24x64xf32>
    %42 = vector.extract_strided_slice %13 {offsets = [24, 0], sizes = [24, 128], strides = [1, 1]} : vector<56x128xf32> to vector<24x128xf32>
    %43 = vector.extract_strided_slice %14 {offsets = [24, 0], sizes = [24, 128], strides = [1, 1]} : vector<56x128xf32> to vector<24x128xf32>
    %44 = vector.extract_strided_slice %15 {offsets = [24, 0], sizes = [24, 128], strides = [1, 1]} : vector<56x128xf32> to vector<24x128xf32>
    %45 = vector.extract_strided_slice %16 {offsets = [24, 0], sizes = [24, 128], strides = [1, 1]} : vector<56x128xf32> to vector<24x128xf32>
    %46 = tpu.concatenate %42, %43, %44, %45 in 1 : vector<24x128xf32>, vector<24x128xf32>, vector<24x128xf32>, vector<24x128xf32> -> vector<24x512xf32>
    %c1536 = arith.constant 1536 : index
    %c0_15 = arith.constant 0 : index
    %47 = vector.load %arg4[%c1536, %c0_15] : memref<2048x64xf32, #tpu.memory_space<vmem>>, vector<512x64xf32>
    %cst_16 = arith.constant dense<0.000000e+00> : vector<24x64xf32>
    %48 = tpu.matmul %46, %47, %cst_16 {dimension_numbers = #tpu.dot_dimension_numbers<[1], [0], [0], [1], [0, 0, 1, 1], [], []>} : vector<24x512xf32>, vector<512x64xf32>, vector<24x64xf32> -> vector<24x64xf32>
    %49 = arith.addf %41, %48 : vector<24x64xf32>
    %c0_17 = arith.constant 0 : index
    %c0_18 = arith.constant 0 : index
    %50 = vector.load %arg5[%c0_17, %c0_18] : memref<1x64xf32, #tpu.memory_space<vmem>>, vector<1x64xf32>
    %51 = vector.broadcast %50 : vector<1x64xf32> to vector<24x64xf32>
    %52 = arith.addf %49, %51 : vector<24x64xf32>
    %cst_19 = arith.constant 0.000000e+00 : f32
    %53 = vector.broadcast %cst_19 : f32 to vector<24x64xf32>
    %54 = arith.cmpf ogt, %52, %53 : vector<24x64xf32>
    %cst_20 = arith.constant 0.00999999977 : f32
    %55 = vector.broadcast %cst_20 : f32 to vector<24x64xf32>
    %56 = arith.mulf %55, %52 : vector<24x64xf32>
    %57 = arith.select %54, %52, %56 : vector<24x64xi1>, vector<24x64xf32>
    %c0_21 = arith.constant 0 : index
    %c0_22 = arith.constant 0 : index
    %58 = vector.load %arg6[%c0_21, %c0_22] : memref<16x24xf32, #tpu.memory_space<vmem>>, vector<16x24xf32>
    %cst_23 = arith.constant dense<0.000000e+00> : vector<16x64xf32>
    %59 = tpu.matmul %58, %57, %cst_23 {dimension_numbers = #tpu.dot_dimension_numbers<[1], [0], [0], [1], [0, 0, 1, 1], [], []>} : vector<16x24xf32>, vector<24x64xf32>, vector<16x64xf32> -> vector<16x64xf32>
    %c0_24 = arith.constant 0 : index
    %c0_25 = arith.constant 0 : index
    %60 = vector.load %arg7[%c0_24, %c0_25] : memref<32x64xf32, #tpu.memory_space<vmem>>, vector<16x64xf32>
    tpu.vector_store %arg7[%c0_24, %c0_25], %59 {strides = array<i32>} : memref<32x64xf32, #tpu.memory_space<vmem>>, vector<16x64xf32>,
    %61 = vector.extract_strided_slice %10 {offsets = [56, 0], sizes = [56, 64], strides = [1, 1]} : vector<112x64xf32> to vector<56x64xf32>
    %c55_i32_26 = arith.constant 55 : i32
    %62 = tpu.dynamic_rotate %61 by %c55_i32_26 dim 0 : vector<56x64xf32>, i32 -> vector<56x64xf32>
    %63 = tpu.concatenate %61, %62 in 1 : vector<56x64xf32>, vector<56x64xf32> -> vector<56x128xf32>
    %c54_i32_27 = arith.constant 54 : i32
    %64 = tpu.dynamic_rotate %63 by %c54_i32_27 dim 0 : vector<56x128xf32>, i32 -> vector<56x128xf32>
    %c52_i32_28 = arith.constant 52 : i32
    %65 = tpu.dynamic_rotate %63 by %c52_i32_28 dim 0 : vector<56x128xf32>, i32 -> vector<56x128xf32>
    %c50_i32_29 = arith.constant 50 : i32
    %66 = tpu.dynamic_rotate %63 by %c50_i32_29 dim 0 : vector<56x128xf32>, i32 -> vector<56x128xf32>
    %cst_30 = arith.constant 0.000000e+00 : f32
    %67 = vector.broadcast %cst_30 : f32 to vector<24x64xf32>
    %68 = vector.extract_strided_slice %63 {offsets = [0, 0], sizes = [24, 128], strides = [1, 1]} : vector<56x128xf32> to vector<24x128xf32>
    %69 = vector.extract_strided_slice %64 {offsets = [0, 0], sizes = [24, 128], strides = [1, 1]} : vector<56x128xf32> to vector<24x128xf32>
    %70 = vector.extract_strided_slice %65 {offsets = [0, 0], sizes = [24, 128], strides = [1, 1]} : vector<56x128xf32> to vector<24x128xf32>
    %71 = vector.extract_strided_slice %66 {offsets = [0, 0], sizes = [24, 128], strides = [1, 1]} : vector<56x128xf32> to vector<24x128xf32>
    %72 = tpu.concatenate %68, %69, %70, %71 in 1 : vector<24x128xf32>, vector<24x128xf32>, vector<24x128xf32>, vector<24x128xf32> -> vector<24x512xf32>
    %c0_31 = arith.constant 0 : index
    %c0_32 = arith.constant 0 : index
    %73 = vector.load %arg4[%c0_31, %c0_32] : memref<2048x64xf32, #tpu.memory_space<vmem>>, vector<512x64xf32>
    %cst_33 = arith.constant dense<0.000000e+00> : vector<24x64xf32>
    %74 = tpu.matmul %72, %73, %cst_33 {dimension_numbers = #tpu.dot_dimension_numbers<[1], [0], [0], [1], [0, 0, 1, 1], [], []>} : vector<24x512xf32>, vector<512x64xf32>, vector<24x64xf32> -> vector<24x64xf32>
    %75 = arith.addf %67, %74 : vector<24x64xf32>
    %76 = vector.extract_strided_slice %63 {offsets = [8, 0], sizes = [24, 128], strides = [1, 1]} : vector<56x128xf32> to vector<24x128xf32>
    %77 = vector.extract_strided_slice %64 {offsets = [8, 0], sizes = [24, 128], strides = [1, 1]} : vector<56x128xf32> to vector<24x128xf32>
    %78 = vector.extract_strided_slice %65 {offsets = [8, 0], sizes = [24, 128], strides = [1, 1]} : vector<56x128xf32> to vector<24x128xf32>
    %79 = vector.extract_strided_slice %66 {offsets = [8, 0], sizes = [24, 128], strides = [1, 1]} : vector<56x128xf32> to vector<24x128xf32>
    %80 = tpu.concatenate %76, %77, %78, %79 in 1 : vector<24x128xf32>, vector<24x128xf32>, vector<24x128xf32>, vector<24x128xf32> -> vector<24x512xf32>
    %c512_34 = arith.constant 512 : index
    %c0_35 = arith.constant 0 : index
    %81 = vector.load %arg4[%c512_34, %c0_35] : memref<2048x64xf32, #tpu.memory_space<vmem>>, vector<512x64xf32>
    %cst_36 = arith.constant dense<0.000000e+00> : vector<24x64xf32>
    %82 = tpu.matmul %80, %81, %cst_36 {dimension_numbers = #tpu.dot_dimension_numbers<[1], [0], [0], [1], [0, 0, 1, 1], [], []>} : vector<24x512xf32>, vector<512x64xf32>, vector<24x64xf32> -> vector<24x64xf32>
    %83 = arith.addf %75, %82 : vector<24x64xf32>
    %84 = vector.extract_strided_slice %63 {offsets = [16, 0], sizes = [24, 128], strides = [1, 1]} : vector<56x128xf32> to vector<24x128xf32>
    %85 = vector.extract_strided_slice %64 {offsets = [16, 0], sizes = [24, 128], strides = [1, 1]} : vector<56x128xf32> to vector<24x128xf32>
    %86 = vector.extract_strided_slice %65 {offsets = [16, 0], sizes = [24, 128], strides = [1, 1]} : vector<56x128xf32> to vector<24x128xf32>
    %87 = vector.extract_strided_slice %66 {offsets = [16, 0], sizes = [24, 128], strides = [1, 1]} : vector<56x128xf32> to vector<24x128xf32>
    %88 = tpu.concatenate %84, %85, %86, %87 in 1 : vector<24x128xf32>, vector<24x128xf32>, vector<24x128xf32>, vector<24x128xf32> -> vector<24x512xf32>
    %c1024_37 = arith.constant 1024 : index
    %c0_38 = arith.constant 0 : index
    %89 = vector.load %arg4[%c1024_37, %c0_38] : memref<2048x64xf32, #tpu.memory_space<vmem>>, vector<512x64xf32>
    %cst_39 = arith.constant dense<0.000000e+00> : vector<24x64xf32>
    %90 = tpu.matmul %88, %89, %cst_39 {dimension_numbers = #tpu.dot_dimension_numbers<[1], [0], [0], [1], [0, 0, 1, 1], [], []>} : vector<24x512xf32>, vector<512x64xf32>, vector<24x64xf32> -> vector<24x64xf32>
    %91 = arith.addf %83, %90 : vector<24x64xf32>
    %92 = vector.extract_strided_slice %63 {offsets = [24, 0], sizes = [24, 128], strides = [1, 1]} : vector<56x128xf32> to vector<24x128xf32>
    %93 = vector.extract_strided_slice %64 {offsets = [24, 0], sizes = [24, 128], strides = [1, 1]} : vector<56x128xf32> to vector<24x128xf32>
    %94 = vector.extract_strided_slice %65 {offsets = [24, 0], sizes = [24, 128], strides = [1, 1]} : vector<56x128xf32> to vector<24x128xf32>
    %95 = vector.extract_strided_slice %66 {offsets = [24, 0], sizes = [24, 128], strides = [1, 1]} : vector<56x128xf32> to vector<24x128xf32>
    %96 = tpu.concatenate %92, %93, %94, %95 in 1 : vector<24x128xf32>, vector<24x128xf32>, vector<24x128xf32>, vector<24x128xf32> -> vector<24x512xf32>
    %c1536_40 = arith.constant 1536 : index
    %c0_41 = arith.constant 0 : index
    %97 = vector.load %arg4[%c1536_40, %c0_41] : memref<2048x64xf32, #tpu.memory_space<vmem>>, vector<512x64xf32>
    %cst_42 = arith.constant dense<0.000000e+00> : vector<24x64xf32>
    %98 = tpu.matmul %96, %97, %cst_42 {dimension_numbers = #tpu.dot_dimension_numbers<[1], [0], [0], [1], [0, 0, 1, 1], [], []>} : vector<24x512xf32>, vector<512x64xf32>, vector<24x64xf32> -> vector<24x64xf32>
    %99 = arith.addf %91, %98 : vector<24x64xf32>
    %c0_43 = arith.constant 0 : index
    %c0_44 = arith.constant 0 : index
    %100 = vector.load %arg5[%c0_43, %c0_44] : memref<1x64xf32, #tpu.memory_space<vmem>>, vector<1x64xf32>
    %101 = vector.broadcast %100 : vector<1x64xf32> to vector<24x64xf32>
    %102 = arith.addf %99, %101 : vector<24x64xf32>
    %cst_45 = arith.constant 0.000000e+00 : f32
    %103 = vector.broadcast %cst_45 : f32 to vector<24x64xf32>
    %104 = arith.cmpf ogt, %102, %103 : vector<24x64xf32>
    %cst_46 = arith.constant 0.00999999977 : f32
    %105 = vector.broadcast %cst_46 : f32 to vector<24x64xf32>
    %106 = arith.mulf %105, %102 : vector<24x64xf32>
    %107 = arith.select %104, %102, %106 : vector<24x64xi1>, vector<24x64xf32>
    %c0_47 = arith.constant 0 : index
    %c0_48 = arith.constant 0 : index
    %108 = vector.load %arg6[%c0_47, %c0_48] : memref<16x24xf32, #tpu.memory_space<vmem>>, vector<16x24xf32>
    %cst_49 = arith.constant dense<0.000000e+00> : vector<16x64xf32>
    %109 = tpu.matmul %108, %107, %cst_49 {dimension_numbers = #tpu.dot_dimension_numbers<[1], [0], [0], [1], [0, 0, 1, 1], [], []>} : vector<16x24xf32>, vector<24x64xf32>, vector<16x64xf32> -> vector<16x64xf32>
    %c16 = arith.constant 16 : index
    %c0_50 = arith.constant 0 : index
    %110 = vector.load %arg7[%c16, %c0_50] : memref<32x64xf32, #tpu.memory_space<vmem>>, vector<16x64xf32>
    tpu.vector_store %arg7[%c16, %c0_50], %109 {strides = array<i32>} : memref<32x64xf32, #tpu.memory_space<vmem>>, vector<16x64xf32>,
    return
  }
  func.func @transform_0(%arg0: i32) -> (i32, i32) {
    %c0_i32 = arith.constant 0 : i32
    %c0_i32_0 = arith.constant 0 : i32
    %c0_i32_1 = arith.constant 0 : i32
    return %c0_i32, %c0_i32_0 : i32, i32
  }
  func.func @transform_1(%arg0: i32) -> (i32, i32) {
    %c0_i32 = arith.constant 0 : i32
    %c0_i32_0 = arith.constant 0 : i32
    %c0_i32_1 = arith.constant 0 : i32
    return %c0_i32, %c0_i32_0 : i32, i32
  }
  func.func @transform_2(%arg0: i32) -> (i32, i32) {
    %c0_i32 = arith.constant 0 : i32
    %c0_i32_0 = arith.constant 0 : i32
    %c0_i32_1 = arith.constant 0 : i32
    return %c0_i32, %c0_i32_0 : i32, i32
  }
  func.func @transform_3(%arg0: i32) -> (i32, i32) {
    %c0_i32 = arith.constant 0 : i32
    %c0_i32_0 = arith.constant 0 : i32
    %c0_i32_1 = arith.constant 0 : i32
    return %c0_i32, %c0_i32_0 : i32, i32
  }
  func.func @transform_4(%arg0: i32) -> (i32, i32) {
    %c0_i32 = arith.constant 0 : i32
    %c0_i32_0 = arith.constant 0 : i32
    %c0_i32_1 = arith.constant 0 : i32
    return %c0_i32, %c0_i32_0 : i32, i32
  }
  func.func @transform_5(%arg0: i32) -> (i32, i32) {
    %c0_i32 = arith.constant 0 : i32
    %c0_i32_0 = arith.constant 0 : i32
    %c0_i32_1 = arith.constant 0 : i32
    return %c0_i32, %c0_i32_0 : i32, i32
  }
  func.func @transform_6(%arg0: i32) -> (i32, i32) {
    %c0_i32 = arith.constant 0 : i32
    %c0_i32_0 = arith.constant 0 : i32
    %c0_i32_1 = arith.constant 0 : i32
    return %c0_i32, %c0_i32_0 : i32, i32
  }
}

</mosaic_0001>

<llo_original>
// kernel: tpu_custom_call.1
$region0: #{tpu_custom_call.1}
  #allocation0 [shape = 'u32[]', space=smem, size = 0x4, offset = 0x4, fixed_abs, tag = 'smem constant byte address 0x4 - core index']
  #allocation1 [shape = 'u32[144,128]{1,0:T(1,128)}', space=vmem, size = 0x12000, scoped, tag = 'internal scratch']
  %s0 = inlined_call_operand.vmem [shape: f32[112,32], index: 0, kind: input, shape index: {}]
  %s1 = inlined_call_operand.vmem [shape: f32[32,64], index: 1, kind: input, shape index: {}]
  %s2 = inlined_call_operand.vmem [shape: f32[1,64], index: 2, kind: input, shape index: {}]
  %s3 = inlined_call_operand.vmem [shape: f32[2048,64], index: 3, kind: input, shape index: {}]
  %s4 = inlined_call_operand.vmem [shape: f32[1,64], index: 4, kind: input, shape index: {}]
  %s5 = inlined_call_operand.vmem [shape: f32[16,24], index: 5, kind: input, shape index: {}]
  %s6 = inlined_call_operand.hbm [shape: f32[32,64], index: 6, kind: output, shape index: {}]
  %s7 = sld [smem:[#allocation0]]
  $region34: #{tpu_custom_call.1} parent=0
    _
  %s9 = ssub.s32 1, %s7
  %s10 = scalar_select 0, %s9, %s7
  $region1: #{tpu_custom_call.1} parent=0
    #allocation2 [shape = 'u8[16384]{0}', space=vmem, size = 0x4000, scoped, tag = 'output window, operand 0, single buffered']
    #allocation3 [shape = 's32[1]{0}', space=sflag, size = 0x4, scoped, tag = 'scoped memory for tpu_custom_call.1']
    %11 = vsyncpa [#allocation3], 0
    // Predicated region
    $region2: #{tpu_custom_call.1} parent=1 // pred_check
      _
    $region3: #{tpu_custom_call.1} parent=1 // pred_check_branch
      %13 = sbr.rel (0) target = $region5
    $region4: #{tpu_custom_call.1} parent=1 // pred_region
      _
    $region5: #{tpu_custom_call.1} parent=1 // pred_fallthru
      _
    // Predicated region
    $region6: #{tpu_custom_call.1} parent=1 // pred_check
      _
    $region7: #{tpu_custom_call.1} parent=1 // pred_check_branch
      %15 = sbr.rel (0) target = $region9
    $region8: #{tpu_custom_call.1} parent=1 // pred_region
      _
    $region9: #{tpu_custom_call.1} parent=1 // pred_fallthru
      _
    // Predicated region
    $region10: #{tpu_custom_call.1} parent=1 // pred_check
      _
    $region11: #{tpu_custom_call.1} parent=1 // pred_check_branch
      %17 = sbr.rel (0) target = $region13
    $region12: #{tpu_custom_call.1} parent=1 // pred_region
      _
    $region13: #{tpu_custom_call.1} parent=1 // pred_fallthru
      _
    // Predicated region
    $region14: #{tpu_custom_call.1} parent=1 // pred_check
      _
    $region15: #{tpu_custom_call.1} parent=1 // pred_check_branch
      %19 = sbr.rel (0) target = $region17
    $region16: #{tpu_custom_call.1} parent=1 // pred_region
      _
    $region17: #{tpu_custom_call.1} parent=1 // pred_fallthru
      _
    // Predicated region
    $region18: #{tpu_custom_call.1} parent=1 // pred_check
      _
    $region19: #{tpu_custom_call.1} parent=1 // pred_check_branch
      %21 = sbr.rel (0) target = $region21
    $region20: #{tpu_custom_call.1} parent=1 // pred_region
      _
    $region21: #{tpu_custom_call.1} parent=1 // pred_fallthru
      _
    // Predicated region
    $region22: #{tpu_custom_call.1} parent=1 // pred_check
      _
    $region23: #{tpu_custom_call.1} parent=1 // pred_check_branch
      %23 = sbr.rel (0) target = $region25
    $region24: #{tpu_custom_call.1} parent=1 // pred_region
      _
    $region25: #{tpu_custom_call.1} parent=1 // pred_fallthru
      _
    %v24 = vld [vmem:[%s0] sm:$0xff]
    %v25 = vld [vmem:[%s0 + $0x8] sm:$0xff]
    %v26 = vld [vmem:[%s0 + $0x10] sm:$0xff]
    %v27 = vld [vmem:[%s0 + $0x18] sm:$0xff]
    %v28 = vld [vmem:[%s0 + $0x20] sm:$0xff]
    %v29 = vld [vmem:[%s0 + $0x28] sm:$0xff]
    %v30 = vld [vmem:[%s0 + $0x30] sm:$0xff]
    %v31 = vld [vmem:[%s0 + $0x38] sm:$0xff]
    %v32 = vld [vmem:[%s0 + $0x40] sm:$0xff]
    %v33 = vld [vmem:[%s0 + $0x48] sm:$0xff]
    %v34 = vld [vmem:[%s0 + $0x50] sm:$0xff]
    %v35 = vld [vmem:[%s0 + $0x58] sm:$0xff]
    %v36 = vld [vmem:[%s0 + $0x60] sm:$0xff]
    %v37 = vld [vmem:[%s0 + $0x68] sm:$0xff]
    %v38 = vld [vmem:[%s1] sm:$0xff]
    %v39 = vld [vmem:[%s1 + $0x8] sm:$0xff]
    %v40 = vld [vmem:[%s1 + $0x10] sm:$0xff]
    %v41 = vld [vmem:[%s1 + $0x18] sm:$0xff]
    %v42 = vld [vmem:[%s2] sm:$0x1]
    %v44 = vlaneseq
    %v45 = vshrl.u32 %v44, 7
    %v46 = vsub.s32 0, %v45
    %v47 = vrot.slane %v42, %v46
    %vm49 = vcmask 261120
    %v51 = vsel %vm49, %v24, 0
    %v54 = vsel %vm49, %v25, 0
    %v57 = vsel %vm49, %v26, 0
    %v60 = vsel %vm49, %v27, 0
    %v63 = vsel %vm49, %v28, 0
    %v66 = vsel %vm49, %v29, 0
    %v69 = vsel %vm49, %v30, 0
    %v72 = vsel %vm49, %v31, 0
    %v75 = vsel %vm49, %v32, 0
    %v78 = vsel %vm49, %v33, 0
    %v81 = vsel %vm49, %v34, 0
    %v84 = vsel %vm49, %v35, 0
    %v87 = vsel %vm49, %v36, 0
    %v90 = vsel %vm49, %v37, 0
    %92 = vmatprep.subr.mxu0 0.0
    %93 = vmatpush1.msra.mxu0 %v38
    %94 = vmatprep.subr.mxu0 0.0
    %95 = vmatpush1.msra.mxu0 %v39
    %96 = vmatprep.subr.mxu0 0.0
    %97 = vmatpush1.msra.mxu0 %v40
    %98 = vmatprep.subr.mxu0 0.0
    %99 = vmatpush1.msra.mxu0 %v41
    %100 = vmatprep.subr.mxu0 0.0
    %101 = vmatpush1.msra.mxu0 0.0
    %102 = vmatprep.subr.mxu0 0.0
    %103 = vmatpush1.msra.mxu0 0.0
    %104 = vmatprep.subr.mxu0 0.0
    %105 = vmatpush1.msra.mxu0 0.0
    %106 = vmatprep.subr.mxu0 0.0
    %107 = vmatpush1.msra.mxu0 0.0
    %108 = vmatprep.subr.mxu0 0.0
    %109 = vmatpush1.msra.mxu0 0.0
    %110 = vmatprep.subr.mxu0 0.0
    %111 = vmatpush1.msra.mxu0 0.0
    %112 = vmatprep.subr.mxu0 0.0
    %113 = vmatpush1.msra.mxu0 0.0
    %114 = vmatprep.subr.mxu0 0.0
    %115 = vmatpush1.msra.mxu0 0.0
    %116 = vmatprep.subr.mxu0 0.0
    %117 = vmatpush1.msra.mxu0 0.0
    %118 = vmatprep.subr.mxu0 0.0
    %119 = vmatpush1.msra.mxu0 0.0
    %120 = vmatprep.subr.mxu0 0.0
    %121 = vmatpush1.msra.mxu0 0.0
    %122 = vmatprep.subr.mxu0 0.0
    %123 = vmatpush1.msra.mxu0 0.0
    %124 = vmatprep.subr.mxu0 0.0
    %125 = vmatpush1.msra.mxu0 0.0
    %126 = vmatprep.subr.mxu0 0.0
    %127 = vmatpush1.msra.mxu0 0.0
    %128 = vmatprep.subr.mxu0 0.0
    %129 = vmatpush1.msra.mxu0 0.0
    %130 = vmatprep.subr.mxu0 0.0
    %131 = vmatpush1.msra.mxu0 0.0
    %132 = vmatprep.subr.mxu0 0.0
    %133 = vmatpush1.msra.mxu0 0.0
    %134 = vmatprep.subr.mxu0 0.0
    %135 = vmatpush1.msra.mxu0 0.0
    %136 = vmatprep.subr.mxu0 0.0
    %137 = vmatpush1.msra.mxu0 0.0
    %138 = vmatprep.subr.mxu0 0.0
    %139 = vmatpush1.msra.mxu0 0.0
    %140 = vmatprep.subr.mxu0 0.0
    %141 = vmatpush1.msra.mxu0 0.0
    %142 = vmatprep.subr.mxu0 0.0
    %143 = vmatpush1.msra.mxu0 0.0
    %144 = vmatprep.subr.mxu0 0.0
    %145 = vmatpush1.msra.mxu0 0.0
    %146 = vmatprep.subr.mxu0 0.0
    %147 = vmatpush1.msra.mxu0 0.0
    %148 = vmatprep.subr.mxu0 0.0
    %149 = vmatpush1.msra.mxu0 0.0
    %150 = vmatprep.subr.mxu0 0.0
    %151 = vmatpush1.msra.mxu0 0.0
    %152 = vmatprep.subr.mxu0 0.0
    %153 = vmatpush1.msra.mxu0 0.0
    %154 = vmatprep.subr.mxu0 0.0
    %155 = vmatpush1.msra.mxu0 0.0
    %156 = vmatprep.mubr.f32.mxu0 0.0
    %157 = vmatmul.mubr.f32.gmra.mrb[0].mxu0 %v51
    %v158 = vpop.f32.mrb[0].mxu0
    %v159 = vadd.f32 %v47, %v158
    %v160 = vpop.f32.mrb[0].mxu0
    %161 = vmatprep.mubr.f32.mxu0 0.0
    %162 = vmatmul.mubr.f32.gmra.mrb[0].mxu0 %v54
    %v163 = vpop.f32.mrb[0].mxu0
    %v164 = vadd.f32 %v47, %v163
    %v165 = vpop.f32.mrb[0].mxu0
    %166 = vmatprep.mubr.f32.mxu0 0.0
    %167 = vmatmul.mubr.f32.gmra.mrb[0].mxu0 %v57
    %v168 = vpop.f32.mrb[0].mxu0
    %v169 = vadd.f32 %v47, %v168
    %v170 = vpop.f32.mrb[0].mxu0
    %171 = vmatprep.mubr.f32.mxu0 0.0
    %172 = vmatmul.mubr.f32.gmra.mrb[0].mxu0 %v60
    %v173 = vpop.f32.mrb[0].mxu0
    %v174 = vadd.f32 %v47, %v173
    %v175 = vpop.f32.mrb[0].mxu0
    %176 = vmatprep.mubr.f32.mxu0 0.0
    %177 = vmatmul.mubr.f32.gmra.mrb[0].mxu0 %v63
    %v178 = vpop.f32.mrb[0].mxu0
    %v179 = vadd.f32 %v47, %v178
    %v180 = vpop.f32.mrb[0].mxu0
    %181 = vmatprep.mubr.f32.mxu0 0.0
    %182 = vmatmul.mubr.f32.gmra.mrb[0].mxu0 %v66
    %v183 = vpop.f32.mrb[0].mxu0
    %v184 = vadd.f32 %v47, %v183
    %v185 = vpop.f32.mrb[0].mxu0
    %186 = vmatprep.mubr.f32.mxu0 0.0
    %187 = vmatmul.mubr.f32.gmra.mrb[0].mxu0 %v69
    %v188 = vpop.f32.mrb[0].mxu0
    %v189 = vadd.f32 %v47, %v188
    %v190 = vpop.f32.mrb[0].mxu0
    %191 = vmatprep.mubr.f32.mxu0 0.0
    %192 = vmatmul.mubr.f32.gmra.mrb[0].mxu0 %v72
    %v193 = vpop.f32.mrb[0].mxu0
    %v194 = vadd.f32 %v47, %v193
    %v195 = vpop.f32.mrb[0].mxu0
    %196 = vmatprep.mubr.f32.mxu0 0.0
    %197 = vmatmul.mubr.f32.gmra.mrb[0].mxu0 %v75
    %v198 = vpop.f32.mrb[0].mxu0
    %v199 = vadd.f32 %v47, %v198
    %v200 = vpop.f32.mrb[0].mxu0
    %201 = vmatprep.mubr.f32.mxu0 0.0
    %202 = vmatmul.mubr.f32.gmra.mrb[0].mxu0 %v78
    %v203 = vpop.f32.mrb[0].mxu0
    %v204 = vadd.f32 %v47, %v203
    %v205 = vpop.f32.mrb[0].mxu0
    %206 = vmatprep.mubr.f32.mxu0 0.0
    %207 = vmatmul.mubr.f32.gmra.mrb[0].mxu0 %v81
    %v208 = vpop.f32.mrb[0].mxu0
    %v209 = vadd.f32 %v47, %v208
    %v210 = vpop.f32.mrb[0].mxu0
    %211 = vmatprep.mubr.f32.mxu0 0.0
    %212 = vmatmul.mubr.f32.gmra.mrb[0].mxu0 %v84
    %v213 = vpop.f32.mrb[0].mxu0
    %v214 = vadd.f32 %v47, %v213
    %v215 = vpop.f32.mrb[0].mxu0
    %216 = vmatprep.mubr.f32.mxu0 0.0
    %217 = vmatmul.mubr.f32.gmra.mrb[0].mxu0 %v87
    %v218 = vpop.f32.mrb[0].mxu0
    %v219 = vadd.f32 %v47, %v218
    %v220 = vpop.f32.mrb[0].mxu0
    %221 = vmatprep.mubr.f32.mxu0 0.0
    %222 = vmatmul.mubr.f32.gmra.mrb[0].mxu0 %v90
    %v223 = vpop.f32.mrb[0].mxu0
    %v224 = vadd.f32 %v47, %v223
    %v225 = vpop.f32.mrb[0].mxu0
    %226 = vdwg.mxu0
    %vm227 = vcmp.gt.f32.partialorder %v159, 0.0
    %vm228 = vcmp.gt.f32.partialorder %v164, 0.0
    %vm229 = vcmp.gt.f32.partialorder %v169, 0.0
    %vm230 = vcmp.gt.f32.partialorder %v174, 0.0
    %vm231 = vcmp.gt.f32.partialorder %v179, 0.0
    %vm232 = vcmp.gt.f32.partialorder %v184, 0.0
    %vm233 = vcmp.gt.f32.partialorder %v189, 0.0
    %vm234 = vcmp.gt.f32.partialorder %v194, 0.0
    %vm235 = vcmp.gt.f32.partialorder %v199, 0.0
    %vm236 = vcmp.gt.f32.partialorder %v204, 0.0
    %vm237 = vcmp.gt.f32.partialorder %v209, 0.0
    %vm238 = vcmp.gt.f32.partialorder %v214, 0.0
    %vm239 = vcmp.gt.f32.partialorder %v219, 0.0
    %vm240 = vcmp.gt.f32.partialorder %v224, 0.0
    %v241 = vmul.f32 %v159, 0.01
    %v242 = vmul.f32 %v164, 0.01
    %v243 = vmul.f32 %v169, 0.01
    %v244 = vmul.f32 %v174, 0.01
    %v245 = vmul.f32 %v179, 0.01
    %v246 = vmul.f32 %v184, 0.01
    %v247 = vmul.f32 %v189, 0.01
    %v248 = vmul.f32 %v194, 0.01
    %v249 = vmul.f32 %v199, 0.01
    %v250 = vmul.f32 %v204, 0.01
    %v251 = vmul.f32 %v209, 0.01
    %v252 = vmul.f32 %v214, 0.01
    %v253 = vmul.f32 %v219, 0.01
    %v254 = vmul.f32 %v224, 0.01
    %v255 = vsel %vm227, %v159, %v241
    %v256 = vsel %vm228, %v164, %v242
    %v257 = vsel %vm229, %v169, %v243
    %v258 = vsel %vm230, %v174, %v244
    %v259 = vsel %vm231, %v179, %v245
    %v260 = vsel %vm232, %v184, %v246
    %v261 = vsel %vm233, %v189, %v247
    %v262 = vsel %vm234, %v194, %v248
    %v263 = vsel %vm235, %v199, %v249
    %v264 = vsel %vm236, %v204, %v250
    %v265 = vsel %vm237, %v209, %v251
    %v266 = vsel %vm238, %v214, %v252
    %v267 = vsel %vm239, %v219, %v253
    %v268 = vsel %vm240, %v224, %v254
    %v269 = vrot.slane %v255, 1
    %v270 = vrot.slane %v256, 1
    %v271 = vrot.slane %v257, 1
    %v272 = vrot.slane %v258, 1
    %v273 = vrot.slane %v259, 1
    %v274 = vrot.slane %v260, 1
    %v275 = vrot.slane %v261, 1
    %v276 = vlaneseq
    %v277 = vshrl.u32 %v276, 7
    %vm278 = vcmp.lt.s32.totalorder %v277, 7
    %v279 = vsel %vm278, %v274, %v275
    %v280 = vsel %vm278, %v273, %v274
    %v281 = vsel %vm278, %v272, %v273
    %v282 = vsel %vm278, %v271, %v272
    %v283 = vsel %vm278, %v270, %v271
    %v284 = vsel %vm278, %v269, %v270
    %v285 = vsel %vm278, %v275, %v269
    %293 = vrot.lane.b32.xlu0 %v284, 64
    %v294 = vpop.permute.xlu0 %293
    %295 = vrot.lane.b32.xlu0 %v283, 64
    %v296 = vpop.permute.xlu0 %295
    %297 = vrot.lane.b32.xlu0 %v282, 64
    %v298 = vpop.permute.xlu0 %297
    %299 = vrot.lane.b32.xlu0 %v281, 64
    %v300 = vpop.permute.xlu0 %299
    %301 = vrot.lane.b32.xlu0 %v280, 64
    %v302 = vpop.permute.xlu0 %301
    %303 = vrot.lane.b32.xlu0 %v279, 64
    %v304 = vpop.permute.xlu0 %303
    %305 = vrot.lane.b32.xlu0 %v285, 64
    %v306 = vpop.permute.xlu0 %305
    %vm314 = vcmask 523264
    %v315 = vsel %vm314, %v255, %v294
    %v316 = vsel %vm314, %v256, %v296
    %v317 = vsel %vm314, %v257, %v298
    %v318 = vsel %vm314, %v258, %v300
    %v319 = vsel %vm314, %v259, %v302
    %v320 = vsel %vm314, %v260, %v304
    %v321 = vsel %vm314, %v261, %v306
    %v322 = vrot.slane %v315, 2
    %v323 = vrot.slane %v316, 2
    %v324 = vrot.slane %v317, 2
    %v325 = vrot.slane %v318, 2
    %v326 = vrot.slane %v319, 2
    %v327 = vrot.slane %v320, 2
    %v328 = vrot.slane %v321, 2
    %vm329 = vcmp.lt.s32.totalorder %v277, 6
    %v330 = vsel %vm329, %v327, %v328
    %v331 = vsel %vm329, %v326, %v327
    %v332 = vsel %vm329, %v325, %v326
    %v333 = vsel %vm329, %v324, %v325
    %v334 = vsel %vm329, %v323, %v324
    %v335 = vsel %vm329, %v322, %v323
    %v336 = vrot.slane %v315, 4
    %v337 = vrot.slane %v316, 4
    %v338 = vrot.slane %v317, 4
    %v339 = vrot.slane %v318, 4
    %v340 = vrot.slane %v319, 4
    %v341 = vrot.slane %v320, 4
    %v342 = vrot.slane %v321, 4
    %vm343 = vcmp.lt.s32.totalorder %v277, 4
    %v344 = vsel %vm343, %v341, %v342
    %v345 = vsel %vm343, %v340, %v341
    %v346 = vsel %vm343, %v339, %v340
    %v347 = vsel %vm343, %v338, %v339
    %v348 = vsel %vm343, %v337, %v338
    %v349 = vsel %vm343, %v336, %v337
    %v350 = vrot.slane %v315, 6
    %v351 = vrot.slane %v316, 6
    %v352 = vrot.slane %v317, 6
    %v353 = vrot.slane %v318, 6
    %v354 = vrot.slane %v319, 6
    %v355 = vrot.slane %v320, 6
    %v356 = vrot.slane %v321, 6
    %vm357 = vcmp.lt.s32.totalorder %v277, 2
    %v358 = vsel %vm357, %v355, %v356
    %v359 = vsel %vm357, %v354, %v355
    %v360 = vsel %vm357, %v353, %v354
    %v361 = vsel %vm357, %v352, %v353
    %v362 = vsel %vm357, %v351, %v352
    %v363 = vsel %vm357, %v350, %v351
    %v364 = vld [vmem:[%s3] sm:$0xff]
    %v365 = vld [vmem:[%s3 + $0x8] sm:$0xff]
    %v366 = vld [vmem:[%s3 + $0x10] sm:$0xff]
    %v367 = vld [vmem:[%s3 + $0x18] sm:$0xff]
    %v368 = vld [vmem:[%s3 + $0x20] sm:$0xff]
    %v369 = vld [vmem:[%s3 + $0x28] sm:$0xff]
    %v370 = vld [vmem:[%s3 + $0x30] sm:$0xff]
    %v371 = vld [vmem:[%s3 + $0x38] sm:$0xff]
    %v372 = vld [vmem:[%s3 + $0x40] sm:$0xff]
    %v373 = vld [vmem:[%s3 + $0x48] sm:$0xff]
    %v374 = vld [vmem:[%s3 + $0x50] sm:$0xff]
    %v375 = vld [vmem:[%s3 + $0x58] sm:$0xff]
    %v376 = vld [vmem:[%s3 + $0x60] sm:$0xff]
    %v377 = vld [vmem:[%s3 + $0x68] sm:$0xff]
    %v378 = vld [vmem:[%s3 + $0x70] sm:$0xff]
    %v379 = vld [vmem:[%s3 + $0x78] sm:$0xff]
    %v380 = vld [vmem:[%s3 + $0x80] sm:$0xff]
    %v381 = vld [vmem:[%s3 + $0x88] sm:$0xff]
    %v382 = vld [vmem:[%s3 + $0x90] sm:$0xff]
    %v383 = vld [vmem:[%s3 + $0x98] sm:$0xff]
    %v384 = vld [vmem:[%s3 + $0xa0] sm:$0xff]
    %v385 = vld [vmem:[%s3 + $0xa8] sm:$0xff]
    %v386 = vld [vmem:[%s3 + $0xb0] sm:$0xff]
    %v387 = vld [vmem:[%s3 + $0xb8] sm:$0xff]
    %v388 = vld [vmem:[%s3 + $0xc0] sm:$0xff]
    %v389 = vld [vmem:[%s3 + $0xc8] sm:$0xff]
    %v390 = vld [vmem:[%s3 + $0xd0] sm:$0xff]
    %v391 = vld [vmem:[%s3 + $0xd8] sm:$0xff]
    %v392 = vld [vmem:[%s3 + $0xe0] sm:$0xff]
    %v393 = vld [vmem:[%s3 + $0xe8] sm:$0xff]
    %v394 = vld [vmem:[%s3 + $0xf0] sm:$0xff]
    %v395 = vld [vmem:[%s3 + $0xf8] sm:$0xff]
    %v396 = vld [vmem:[%s3 + $0x100] sm:$0xff]
    %v397 = vld [vmem:[%s3 + $0x108] sm:$0xff]
    %v398 = vld [vmem:[%s3 + $0x110] sm:$0xff]
    %v399 = vld [vmem:[%s3 + $0x118] sm:$0xff]
    %v400 = vld [vmem:[%s3 + $0x120] sm:$0xff]
    %v401 = vld [vmem:[%s3 + $0x128] sm:$0xff]
    %v402 = vld [vmem:[%s3 + $0x130] sm:$0xff]
    %v403 = vld [vmem:[%s3 + $0x138] sm:$0xff]
    %v404 = vld [vmem:[%s3 + $0x140] sm:$0xff]
    %v405 = vld [vmem:[%s3 + $0x148] sm:$0xff]
    %v406 = vld [vmem:[%s3 + $0x150] sm:$0xff]
    %v407 = vld [vmem:[%s3 + $0x158] sm:$0xff]
    %v408 = vld [vmem:[%s3 + $0x160] sm:$0xff]
    %v409 = vld [vmem:[%s3 + $0x168] sm:$0xff]
    %v410 = vld [vmem:[%s3 + $0x170] sm:$0xff]
    %v411 = vld [vmem:[%s3 + $0x178] sm:$0xff]
    %v412 = vld [vmem:[%s3 + $0x180] sm:$0xff]
    %v413 = vld [vmem:[%s3 + $0x188] sm:$0xff]
    %v414 = vld [vmem:[%s3 + $0x190] sm:$0xff]
    %v415 = vld [vmem:[%s3 + $0x198] sm:$0xff]
    %v416 = vld [vmem:[%s3 + $0x1a0] sm:$0xff]
    %v417 = vld [vmem:[%s3 + $0x1a8] sm:$0xff]
    %v418 = vld [vmem:[%s3 + $0x1b0] sm:$0xff]
    %v419 = vld [vmem:[%s3 + $0x1b8] sm:$0xff]
    %v420 = vld [vmem:[%s3 + $0x1c0] sm:$0xff]
    %v421 = vld [vmem:[%s3 + $0x1c8] sm:$0xff]
    %v422 = vld [vmem:[%s3 + $0x1d0] sm:$0xff]
    %v423 = vld [vmem:[%s3 + $0x1d8] sm:$0xff]
    %v424 = vld [vmem:[%s3 + $0x1e0] sm:$0xff]
    %v425 = vld [vmem:[%s3 + $0x1e8] sm:$0xff]
    %v426 = vld [vmem:[%s3 + $0x1f0] sm:$0xff]
    %v427 = vld [vmem:[%s3 + $0x1f8] sm:$0xff]
    %v428 = vld [vmem:[%s3 + $0x200] sm:$0xff]
    %v429 = vld [vmem:[%s3 + $0x208] sm:$0xff]
    %v430 = vld [vmem:[%s3 + $0x210] sm:$0xff]
    %v431 = vld [vmem:[%s3 + $0x218] sm:$0xff]
    %v432 = vld [vmem:[%s3 + $0x220] sm:$0xff]
    %v433 = vld [vmem:[%s3 + $0x228] sm:$0xff]
    %v434 = vld [vmem:[%s3 + $0x230] sm:$0xff]
    %v435 = vld [vmem:[%s3 + $0x238] sm:$0xff]
    %v436 = vld [vmem:[%s3 + $0x240] sm:$0xff]
    %v437 = vld [vmem:[%s3 + $0x248] sm:$0xff]
    %v438 = vld [vmem:[%s3 + $0x250] sm:$0xff]
    %v439 = vld [vmem:[%s3 + $0x258] sm:$0xff]
    %v440 = vld [vmem:[%s3 + $0x260] sm:$0xff]
    %v441 = vld [vmem:[%s3 + $0x268] sm:$0xff]
    %v442 = vld [vmem:[%s3 + $0x270] sm:$0xff]
    %v443 = vld [vmem:[%s3 + $0x278] sm:$0xff]
    %v444 = vld [vmem:[%s3 + $0x280] sm:$0xff]
    %v445 = vld [vmem:[%s3 + $0x288] sm:$0xff]
    %v446 = vld [vmem:[%s3 + $0x290] sm:$0xff]
    %v447 = vld [vmem:[%s3 + $0x298] sm:$0xff]
    %v448 = vld [vmem:[%s3 + $0x2a0] sm:$0xff]
    %v449 = vld [vmem:[%s3 + $0x2a8] sm:$0xff]
    %v450 = vld [vmem:[%s3 + $0x2b0] sm:$0xff]
    %v451 = vld [vmem:[%s3 + $0x2b8] sm:$0xff]
    %v452 = vld [vmem:[%s3 + $0x2c0] sm:$0xff]
    %v453 = vld [vmem:[%s3 + $0x2c8] sm:$0xff]
    %v454 = vld [vmem:[%s3 + $0x2d0] sm:$0xff]
    %v455 = vld [vmem:[%s3 + $0x2d8] sm:$0xff]
    %v456 = vld [vmem:[%s3 + $0x2e0] sm:$0xff]
    %v457 = vld [vmem:[%s3 + $0x2e8] sm:$0xff]
    %v458 = vld [vmem:[%s3 + $0x2f0] sm:$0xff]
    %v459 = vld [vmem:[%s3 + $0x2f8] sm:$0xff]
    %v460 = vld [vmem:[%s3 + $0x300] sm:$0xff]
    %v461 = vld [vmem:[%s3 + $0x308] sm:$0xff]
    %v462 = vld [vmem:[%s3 + $0x310] sm:$0xff]
    %v463 = vld [vmem:[%s3 + $0x318] sm:$0xff]
    %v464 = vld [vmem:[%s3 + $0x320] sm:$0xff]
    %v465 = vld [vmem:[%s3 + $0x328] sm:$0xff]
    %v466 = vld [vmem:[%s3 + $0x330] sm:$0xff]
    %v467 = vld [vmem:[%s3 + $0x338] sm:$0xff]
    %v468 = vld [vmem:[%s3 + $0x340] sm:$0xff]
    %v469 = vld [vmem:[%s3 + $0x348] sm:$0xff]
    %v470 = vld [vmem:[%s3 + $0x350] sm:$0xff]
    %v471 = vld [vmem:[%s3 + $0x358] sm:$0xff]
    %v472 = vld [vmem:[%s3 + $0x360] sm:$0xff]
    %v473 = vld [vmem:[%s3 + $0x368] sm:$0xff]
    %v474 = vld [vmem:[%s3 + $0x370] sm:$0xff]
    %v475 = vld [vmem:[%s3 + $0x378] sm:$0xff]
    %v476 = vld [vmem:[%s3 + $0x380] sm:$0xff]
    %v477 = vld [vmem:[%s3 + $0x388] sm:$0xff]
    %v478 = vld [vmem:[%s3 + $0x390] sm:$0xff]
    %v479 = vld [vmem:[%s3 + $0x398] sm:$0xff]
    %v480 = vld [vmem:[%s3 + $0x3a0] sm:$0xff]
    %v481 = vld [vmem:[%s3 + $0x3a8] sm:$0xff]
    %v482 = vld [vmem:[%s3 + $0x3b0] sm:$0xff]
    %v483 = vld [vmem:[%s3 + $0x3b8] sm:$0xff]
    %v484 = vld [vmem:[%s3 + $0x3c0] sm:$0xff]
    %v485 = vld [vmem:[%s3 + $0x3c8] sm:$0xff]
    %v486 = vld [vmem:[%s3 + $0x3d0] sm:$0xff]
    %v487 = vld [vmem:[%s3 + $0x3d8] sm:$0xff]
    %v488 = vld [vmem:[%s3 + $0x3e0] sm:$0xff]
    %v489 = vld [vmem:[%s3 + $0x3e8] sm:$0xff]
    %v490 = vld [vmem:[%s3 + $0x3f0] sm:$0xff]
    %v491 = vld [vmem:[%s3 + $0x3f8] sm:$0xff]
    %492 = vmatprep.subr.mxu0 0.0
    %493 = vmatpush1.msra.mxu0 %v428
    %494 = vmatprep.subr.mxu0 0.0
    %495 = vmatpush1.msra.mxu0 %v429
    %496 = vmatprep.subr.mxu0 0.0
    %497 = vmatpush1.msra.mxu0 %v430
    %498 = vmatprep.subr.mxu0 0.0
    %499 = vmatpush1.msra.mxu0 %v431
    %500 = vmatprep.subr.mxu0 0.0
    %501 = vmatpush1.msra.mxu0 %v432
    %502 = vmatprep.subr.mxu0 0.0
    %503 = vmatpush1.msra.mxu0 %v433
    %504 = vmatprep.subr.mxu0 0.0
    %505 = vmatpush1.msra.mxu0 %v434
    %506 = vmatprep.subr.mxu0 0.0
    %507 = vmatpush1.msra.mxu0 %v435
    %508 = vmatprep.subr.mxu0 0.0
    %509 = vmatpush1.msra.mxu0 %v436
    %510 = vmatprep.subr.mxu0 0.0
    %511 = vmatpush1.msra.mxu0 %v437
    %512 = vmatprep.subr.mxu0 0.0
    %513 = vmatpush1.msra.mxu0 %v438
    %514 = vmatprep.subr.mxu0 0.0
    %515 = vmatpush1.msra.mxu0 %v439
    %516 = vmatprep.subr.mxu0 0.0
    %517 = vmatpush1.msra.mxu0 %v440
    %518 = vmatprep.subr.mxu0 0.0
    %519 = vmatpush1.msra.mxu0 %v441
    %520 = vmatprep.subr.mxu0 0.0
    %521 = vmatpush1.msra.mxu0 %v442
    %522 = vmatprep.subr.mxu0 0.0
    %523 = vmatpush1.msra.mxu0 %v443
    %524 = vmatprep.subr.mxu0 0.0
    %525 = vmatpush1.msra.mxu0 %v444
    %526 = vmatprep.subr.mxu0 0.0
    %527 = vmatpush1.msra.mxu0 %v445
    %528 = vmatprep.subr.mxu0 0.0
    %529 = vmatpush1.msra.mxu0 %v446
    %530 = vmatprep.subr.mxu0 0.0
    %531 = vmatpush1.msra.mxu0 %v447
    %532 = vmatprep.subr.mxu0 0.0
    %533 = vmatpush1.msra.mxu0 %v448
    %534 = vmatprep.subr.mxu0 0.0
    %535 = vmatpush1.msra.mxu0 %v449
    %536 = vmatprep.subr.mxu0 0.0
    %537 = vmatpush1.msra.mxu0 %v450
    %538 = vmatprep.subr.mxu0 0.0
    %539 = vmatpush1.msra.mxu0 %v451
    %540 = vmatprep.subr.mxu0 0.0
    %541 = vmatpush1.msra.mxu0 %v452
    %542 = vmatprep.subr.mxu0 0.0
    %543 = vmatpush1.msra.mxu0 %v453
    %544 = vmatprep.subr.mxu0 0.0
    %545 = vmatpush1.msra.mxu0 %v454
    %546 = vmatprep.subr.mxu0 0.0
    %547 = vmatpush1.msra.mxu0 %v455
    %548 = vmatprep.subr.mxu0 0.0
    %549 = vmatpush1.msra.mxu0 %v456
    %550 = vmatprep.subr.mxu0 0.0
    %551 = vmatpush1.msra.mxu0 %v457
    %552 = vmatprep.subr.mxu0 0.0
    %553 = vmatpush1.msra.mxu0 %v458
    %554 = vmatprep.subr.mxu0 0.0
    %555 = vmatpush1.msra.mxu0 %v459
    %556 = vmatprep.mubr.f32.mxu0 %v334
    %557 = vmatmul.mubr.f32.gmra.mrb[0].mxu0 %v316
    %v558 = vpop.f32.mrb[0].mxu0
    %v559 = vadd.f32 0.0, %v558
    %v560 = vpop.f32.mrb[0].mxu0
    %561 = vmatprep.mubr.f32.mxu0 %v333
    %562 = vmatmul.mubr.f32.gmra.mrb[0].mxu0 %v317
    %v563 = vpop.f32.mrb[0].mxu0
    %v564 = vadd.f32 0.0, %v563
    %v565 = vpop.f32.mrb[0].mxu0
    %566 = vmatprep.mubr.f32.mxu0 %v332
    %567 = vmatmul.mubr.f32.gmra.mrb[0].mxu0 %v318
    %v568 = vpop.f32.mrb[0].mxu0
    %v569 = vadd.f32 0.0, %v568
    %v570 = vpop.f32.mrb[0].mxu0
    %571 = vdwg.mxu0
    %572 = vmatprep.subr.mxu0 0.0
    %573 = vmatpush1.msra.mxu0 %v460
    %574 = vmatprep.subr.mxu0 0.0
    %575 = vmatpush1.msra.mxu0 %v461
    %576 = vmatprep.subr.mxu0 0.0
    %577 = vmatpush1.msra.mxu0 %v462
    %578 = vmatprep.subr.mxu0 0.0
    %579 = vmatpush1.msra.mxu0 %v463
    %580 = vmatprep.subr.mxu0 0.0
    %581 = vmatpush1.msra.mxu0 %v464
    %582 = vmatprep.subr.mxu0 0.0
    %583 = vmatpush1.msra.mxu0 %v465
    %584 = vmatprep.subr.mxu0 0.0
    %585 = vmatpush1.msra.mxu0 %v466
    %586 = vmatprep.subr.mxu0 0.0
    %587 = vmatpush1.msra.mxu0 %v467
    %588 = vmatprep.subr.mxu0 0.0
    %589 = vmatpush1.msra.mxu0 %v468
    %590 = vmatprep.subr.mxu0 0.0
    %591 = vmatpush1.msra.mxu0 %v469
    %592 = vmatprep.subr.mxu0 0.0
    %593 = vmatpush1.msra.mxu0 %v470
    %594 = vmatprep.subr.mxu0 0.0
    %595 = vmatpush1.msra.mxu0 %v471
    %596 = vmatprep.subr.mxu0 0.0
    %597 = vmatpush1.msra.mxu0 %v472
    %598 = vmatprep.subr.mxu0 0.0
    %599 = vmatpush1.msra.mxu0 %v473
    %600 = vmatprep.subr.mxu0 0.0
    %601 = vmatpush1.msra.mxu0 %v474
    %602 = vmatprep.subr.mxu0 0.0
    %603 = vmatpush1.msra.mxu0 %v475
    %604 = vmatprep.subr.mxu0 0.0
    %605 = vmatpush1.msra.mxu0 %v476
    %606 = vmatprep.subr.mxu0 0.0
    %607 = vmatpush1.msra.mxu0 %v477
    %608 = vmatprep.subr.mxu0 0.0
    %609 = vmatpush1.msra.mxu0 %v478
    %610 = vmatprep.subr.mxu0 0.0
    %611 = vmatpush1.msra.mxu0 %v479
    %612 = vmatprep.subr.mxu0 0.0
    %613 = vmatpush1.msra.mxu0 %v480
    %614 = vmatprep.subr.mxu0 0.0
    %615 = vmatpush1.msra.mxu0 %v481
    %616 = vmatprep.subr.mxu0 0.0
    %617 = vmatpush1.msra.mxu0 %v482
    %618 = vmatprep.subr.mxu0 0.0
    %619 = vmatpush1.msra.mxu0 %v483
    %620 = vmatprep.subr.mxu0 0.0
    %621 = vmatpush1.msra.mxu0 %v484
    %622 = vmatprep.subr.mxu0 0.0
    %623 = vmatpush1.msra.mxu0 %v485
    %624 = vmatprep.subr.mxu0 0.0
    %625 = vmatpush1.msra.mxu0 %v486
    %626 = vmatprep.subr.mxu0 0.0
    %627 = vmatpush1.msra.mxu0 %v487
    %628 = vmatprep.subr.mxu0 0.0
    %629 = vmatpush1.msra.mxu0 %v488
    %630 = vmatprep.subr.mxu0 0.0
    %631 = vmatpush1.msra.mxu0 %v489
    %632 = vmatprep.subr.mxu0 0.0
    %633 = vmatpush1.msra.mxu0 %v490
    %634 = vmatprep.subr.mxu0 0.0
    %635 = vmatpush1.msra.mxu0 %v491
    %636 = vmatprep.mubr.f32.mxu0 %v362
    %637 = vmatmul.mubr.f32.gmra.mrb[0].mxu0 %v348
    %v638 = vpop.f32.mrb[0].mxu0
    %v639 = vadd.f32 %v559, %v638
    %v640 = vpop.f32.mrb[0].mxu0
    %641 = vmatprep.mubr.f32.mxu0 %v361
    %642 = vmatmul.mubr.f32.gmra.mrb[0].mxu0 %v347
    %v643 = vpop.f32.mrb[0].mxu0
    %v644 = vadd.f32 %v564, %v643
    %v645 = vpop.f32.mrb[0].mxu0
    %646 = vmatprep.mubr.f32.mxu0 %v360
    %647 = vmatmul.mubr.f32.gmra.mrb[0].mxu0 %v346
    %v648 = vpop.f32.mrb[0].mxu0
    %v649 = vadd.f32 %v569, %v648
    %v650 = vpop.f32.mrb[0].mxu0
    %651 = vdwg.mxu0
    %652 = vmatprep.subr.mxu0 0.0
    %653 = vmatpush1.msra.mxu0 %v364
    %654 = vmatprep.subr.mxu0 0.0
    %655 = vmatpush1.msra.mxu0 %v365
    %656 = vmatprep.subr.mxu0 0.0
    %657 = vmatpush1.msra.mxu0 %v366
    %658 = vmatprep.subr.mxu0 0.0
    %659 = vmatpush1.msra.mxu0 %v367
    %660 = vmatprep.subr.mxu0 0.0
    %661 = vmatpush1.msra.mxu0 %v368
    %662 = vmatprep.subr.mxu0 0.0
    %663 = vmatpush1.msra.mxu0 %v369
    %664 = vmatprep.subr.mxu0 0.0
    %665 = vmatpush1.msra.mxu0 %v370
    %666 = vmatprep.subr.mxu0 0.0
    %667 = vmatpush1.msra.mxu0 %v371
    %668 = vmatprep.subr.mxu0 0.0
    %669 = vmatpush1.msra.mxu0 %v372
    %670 = vmatprep.subr.mxu0 0.0
    %671 = vmatpush1.msra.mxu0 %v373
    %672 = vmatprep.subr.mxu0 0.0
    %673 = vmatpush1.msra.mxu0 %v374
    %674 = vmatprep.subr.mxu0 0.0
    %675 = vmatpush1.msra.mxu0 %v375
    %676 = vmatprep.subr.mxu0 0.0
    %677 = vmatpush1.msra.mxu0 %v376
    %678 = vmatprep.subr.mxu0 0.0
    %679 = vmatpush1.msra.mxu0 %v377
    %680 = vmatprep.subr.mxu0 0.0
    %681 = vmatpush1.msra.mxu0 %v378
    %682 = vmatprep.subr.mxu0 0.0
    %683 = vmatpush1.msra.mxu0 %v379
    %684 = vmatprep.subr.mxu0 0.0
    %685 = vmatpush1.msra.mxu0 %v380
    %686 = vmatprep.subr.mxu0 0.0
    %687 = vmatpush1.msra.mxu0 %v381
    %688 = vmatprep.subr.mxu0 0.0
    %689 = vmatpush1.msra.mxu0 %v382
    %690 = vmatprep.subr.mxu0 0.0
    %691 = vmatpush1.msra.mxu0 %v383
    %692 = vmatprep.subr.mxu0 0.0
    %693 = vmatpush1.msra.mxu0 %v384
    %694 = vmatprep.subr.mxu0 0.0
    %695 = vmatpush1.msra.mxu0 %v385
    %696 = vmatprep.subr.mxu0 0.0
    %697 = vmatpush1.msra.mxu0 %v386
    %698 = vmatprep.subr.mxu0 0.0
    %699 = vmatpush1.msra.mxu0 %v387
    %700 = vmatprep.subr.mxu0 0.0
    %701 = vmatpush1.msra.mxu0 %v388
    %702 = vmatprep.subr.mxu0 0.0
    %703 = vmatpush1.msra.mxu0 %v389
    %704 = vmatprep.subr.mxu0 0.0
    %705 = vmatpush1.msra.mxu0 %v390
    %706 = vmatprep.subr.mxu0 0.0
    %707 = vmatpush1.msra.mxu0 %v391
    %708 = vmatprep.subr.mxu0 0.0
    %709 = vmatpush1.msra.mxu0 %v392
    %710 = vmatprep.subr.mxu0 0.0
    %711 = vmatpush1.msra.mxu0 %v393
    %712 = vmatprep.subr.mxu0 0.0
    %713 = vmatpush1.msra.mxu0 %v394
    %714 = vmatprep.subr.mxu0 0.0
    %715 = vmatpush1.msra.mxu0 %v395
    %716 = vmatprep.mubr.f32.mxu0 %v335
    %717 = vmatmul.mubr.f32.gmra.mrb[0].mxu0 %v315
    %v718 = vpop.f32.mrb[0].mxu0
    %v719 = vadd.f32 %v639, %v718
    %v720 = vpop.f32.mrb[0].mxu0
    %721 = vmatprep.mubr.f32.mxu0 %v334
    %722 = vmatmul.mubr.f32.gmra.mrb[0].mxu0 %v316
    %v723 = vpop.f32.mrb[0].mxu0
    %v724 = vadd.f32 %v644, %v723
    %v725 = vpop.f32.mrb[0].mxu0
    %726 = vmatprep.mubr.f32.mxu0 %v333
    %727 = vmatmul.mubr.f32.gmra.mrb[0].mxu0 %v317
    %v728 = vpop.f32.mrb[0].mxu0
    %v729 = vadd.f32 %v649, %v728
    %v730 = vpop.f32.mrb[0].mxu0
    %731 = vdwg.mxu0
    %732 = vmatprep.subr.mxu0 0.0
    %733 = vmatpush1.msra.mxu0 %v396
    %734 = vmatprep.subr.mxu0 0.0
    %735 = vmatpush1.msra.mxu0 %v397
    %736 = vmatprep.subr.mxu0 0.0
    %737 = vmatpush1.msra.mxu0 %v398
    %738 = vmatprep.subr.mxu0 0.0
    %739 = vmatpush1.msra.mxu0 %v399
    %740 = vmatprep.subr.mxu0 0.0
    %741 = vmatpush1.msra.mxu0 %v400
    %742 = vmatprep.subr.mxu0 0.0
    %743 = vmatpush1.msra.mxu0 %v401
    %744 = vmatprep.subr.mxu0 0.0
    %745 = vmatpush1.msra.mxu0 %v402
    %746 = vmatprep.subr.mxu0 0.0
    %747 = vmatpush1.msra.mxu0 %v403
    %748 = vmatprep.subr.mxu0 0.0
    %749 = vmatpush1.msra.mxu0 %v404
    %750 = vmatprep.subr.mxu0 0.0
    %751 = vmatpush1.msra.mxu0 %v405
    %752 = vmatprep.subr.mxu0 0.0
    %753 = vmatpush1.msra.mxu0 %v406
    %754 = vmatprep.subr.mxu0 0.0
    %755 = vmatpush1.msra.mxu0 %v407
    %756 = vmatprep.subr.mxu0 0.0
    %757 = vmatpush1.msra.mxu0 %v408
    %758 = vmatprep.subr.mxu0 0.0
    %759 = vmatpush1.msra.mxu0 %v409
    %760 = vmatprep.subr.mxu0 0.0
    %761 = vmatpush1.msra.mxu0 %v410
    %762 = vmatprep.subr.mxu0 0.0
    %763 = vmatpush1.msra.mxu0 %v411
    %764 = vmatprep.subr.mxu0 0.0
    %765 = vmatpush1.msra.mxu0 %v412
    %766 = vmatprep.subr.mxu0 0.0
    %767 = vmatpush1.msra.mxu0 %v413
    %768 = vmatprep.subr.mxu0 0.0
    %769 = vmatpush1.msra.mxu0 %v414
    %770 = vmatprep.subr.mxu0 0.0
    %771 = vmatpush1.msra.mxu0 %v415
    %772 = vmatprep.subr.mxu0 0.0
    %773 = vmatpush1.msra.mxu0 %v416
    %774 = vmatprep.subr.mxu0 0.0
    %775 = vmatpush1.msra.mxu0 %v417
    %776 = vmatprep.subr.mxu0 0.0
    %777 = vmatpush1.msra.mxu0 %v418
    %778 = vmatprep.subr.mxu0 0.0
    %779 = vmatpush1.msra.mxu0 %v419
    %780 = vmatprep.subr.mxu0 0.0
    %781 = vmatpush1.msra.mxu0 %v420
    %782 = vmatprep.subr.mxu0 0.0
    %783 = vmatpush1.msra.mxu0 %v421
    %784 = vmatprep.subr.mxu0 0.0
    %785 = vmatpush1.msra.mxu0 %v422
    %786 = vmatprep.subr.mxu0 0.0
    %787 = vmatpush1.msra.mxu0 %v423
    %788 = vmatprep.subr.mxu0 0.0
    %789 = vmatpush1.msra.mxu0 %v424
    %790 = vmatprep.subr.mxu0 0.0
    %791 = vmatpush1.msra.mxu0 %v425
    %792 = vmatprep.subr.mxu0 0.0
    %793 = vmatpush1.msra.mxu0 %v426
    %794 = vmatprep.subr.mxu0 0.0
    %795 = vmatpush1.msra.mxu0 %v427
    %796 = vmatprep.mubr.f32.mxu0 %v363
    %797 = vmatmul.mubr.f32.gmra.mrb[0].mxu0 %v349
    %v798 = vpop.f32.mrb[0].mxu0
    %v799 = vadd.f32 %v719, %v798
    %v800 = vpop.f32.mrb[0].mxu0
    %801 = vmatprep.mubr.f32.mxu0 %v362
    %802 = vmatmul.mubr.f32.gmra.mrb[0].mxu0 %v348
    %v803 = vpop.f32.mrb[0].mxu0
    %v804 = vadd.f32 %v724, %v803
    %v805 = vpop.f32.mrb[0].mxu0
    %806 = vmatprep.mubr.f32.mxu0 %v361
    %807 = vmatmul.mubr.f32.gmra.mrb[0].mxu0 %v347
    %v808 = vpop.f32.mrb[0].mxu0
    %v809 = vadd.f32 %v729, %v808
    %v810 = vpop.f32.mrb[0].mxu0
    %811 = vdwg.mxu0
    %v812 = vld [vmem:[%s3 + $0x400] sm:$0xff]
    %v813 = vld [vmem:[%s3 + $0x408] sm:$0xff]
    %v814 = vld [vmem:[%s3 + $0x410] sm:$0xff]
    %v815 = vld [vmem:[%s3 + $0x418] sm:$0xff]
    %v816 = vld [vmem:[%s3 + $0x420] sm:$0xff]
    %v817 = vld [vmem:[%s3 + $0x428] sm:$0xff]
    %v818 = vld [vmem:[%s3 + $0x430] sm:$0xff]
    %v819 = vld [vmem:[%s3 + $0x438] sm:$0xff]
    %v820 = vld [vmem:[%s3 + $0x440] sm:$0xff]
    %v821 = vld [vmem:[%s3 + $0x448] sm:$0xff]
    %v822 = vld [vmem:[%s3 + $0x450] sm:$0xff]
    %v823 = vld [vmem:[%s3 + $0x458] sm:$0xff]
    %v824 = vld [vmem:[%s3 + $0x460] sm:$0xff]
    %v825 = vld [vmem:[%s3 + $0x468] sm:$0xff]
    %v826 = vld [vmem:[%s3 + $0x470] sm:$0xff]
    %v827 = vld [vmem:[%s3 + $0x478] sm:$0xff]
    %v828 = vld [vmem:[%s3 + $0x480] sm:$0xff]
    %v829 = vld [vmem:[%s3 + $0x488] sm:$0xff]
    %v830 = vld [vmem:[%s3 + $0x490] sm:$0xff]
    %v831 = vld [vmem:[%s3 + $0x498] sm:$0xff]
    %v832 = vld [vmem:[%s3 + $0x4a0] sm:$0xff]
    %v833 = vld [vmem:[%s3 + $0x4a8] sm:$0xff]
    %v834 = vld [vmem:[%s3 + $0x4b0] sm:$0xff]
    %v835 = vld [vmem:[%s3 + $0x4b8] sm:$0xff]
    %v836 = vld [vmem:[%s3 + $0x4c0] sm:$0xff]
    %v837 = vld [vmem:[%s3 + $0x4c8] sm:$0xff]
    %v838 = vld [vmem:[%s3 + $0x4d0] sm:$0xff]
    %v839 = vld [vmem:[%s3 + $0x4d8] sm:$0xff]
    %v840 = vld [vmem:[%s3 + $0x4e0] sm:$0xff]
    %v841 = vld [vmem:[%s3 + $0x4e8] sm:$0xff]
    %v842 = vld [vmem:[%s3 + $0x4f0] sm:$0xff]
    %v843 = vld [vmem:[%s3 + $0x4f8] sm:$0xff]
    %v844 = vld [vmem:[%s3 + $0x500] sm:$0xff]
    %v845 = vld [vmem:[%s3 + $0x508] sm:$0xff]
    %v846 = vld [vmem:[%s3 + $0x510] sm:$0xff]
    %v847 = vld [vmem:[%s3 + $0x518] sm:$0xff]
    %v848 = vld [vmem:[%s3 + $0x520] sm:$0xff]
    %v849 = vld [vmem:[%s3 + $0x528] sm:$0xff]
    %v850 = vld [vmem:[%s3 + $0x530] sm:$0xff]
    %v851 = vld [vmem:[%s3 + $0x538] sm:$0xff]
    %v852 = vld [vmem:[%s3 + $0x540] sm:$0xff]
    %v853 = vld [vmem:[%s3 + $0x548] sm:$0xff]
    %v854 = vld [vmem:[%s3 + $0x550] sm:$0xff]
    %v855 = vld [vmem:[%s3 + $0x558] sm:$0xff]
    %v856 = vld [vmem:[%s3 + $0x560] sm:$0xff]
    %v857 = vld [vmem:[%s3 + $0x568] sm:$0xff]
    %v858 = vld [vmem:[%s3 + $0x570] sm:$0xff]
    %v859 = vld [vmem:[%s3 + $0x578] sm:$0xff]
    %v860 = vld [vmem:[%s3 + $0x580] sm:$0xff]
    %v861 = vld [vmem:[%s3 + $0x588] sm:$0xff]
    %v862 = vld [vmem:[%s3 + $0x590] sm:$0xff]
    %v863 = vld [vmem:[%s3 + $0x598] sm:$0xff]
    %v864 = vld [vmem:[%s3 + $0x5a0] sm:$0xff]
    %v865 = vld [vmem:[%s3 + $0x5a8] sm:$0xff]
    %v866 = vld [vmem:[%s3 + $0x5b0] sm:$0xff]
    %v867 = vld [vmem:[%s3 + $0x5b8] sm:$0xff]
    %v868 = vld [vmem:[%s3 + $0x5c0] sm:$0xff]
    %v869 = vld [vmem:[%s3 + $0x5c8] sm:$0xff]
    %v870 = vld [vmem:[%s3 + $0x5d0] sm:$0xff]
    %v871 = vld [vmem:[%s3 + $0x5d8] sm:$0xff]
    %v872 = vld [vmem:[%s3 + $0x5e0] sm:$0xff]
    %v873 = vld [vmem:[%s3 + $0x5e8] sm:$0xff]
    %v874 = vld [vmem:[%s3 + $0x5f0] sm:$0xff]
    %v875 = vld [vmem:[%s3 + $0x5f8] sm:$0xff]
    %876 = vmatprep.subr.mxu0 0.0
    %877 = vmatpush1.msra.mxu0 %v812
    %878 = vmatprep.subr.mxu0 0.0
    %879 = vmatpush1.msra.mxu0 %v813
    %880 = vmatprep.subr.mxu0 0.0
    %881 = vmatpush1.msra.mxu0 %v814
    %882 = vmatprep.subr.mxu0 0.0
    %883 = vmatpush1.msra.mxu0 %v815
    %884 = vmatprep.subr.mxu0 0.0
    %885 = vmatpush1.msra.mxu0 %v816
    %886 = vmatprep.subr.mxu0 0.0
    %887 = vmatpush1.msra.mxu0 %v817
    %888 = vmatprep.subr.mxu0 0.0
    %889 = vmatpush1.msra.mxu0 %v818
    %890 = vmatprep.subr.mxu0 0.0
    %891 = vmatpush1.msra.mxu0 %v819
    %892 = vmatprep.subr.mxu0 0.0
    %893 = vmatpush1.msra.mxu0 %v820
    %894 = vmatprep.subr.mxu0 0.0
    %895 = vmatpush1.msra.mxu0 %v821
    %896 = vmatprep.subr.mxu0 0.0
    %897 = vmatpush1.msra.mxu0 %v822
    %898 = vmatprep.subr.mxu0 0.0
    %899 = vmatpush1.msra.mxu0 %v823
    %900 = vmatprep.subr.mxu0 0.0
    %901 = vmatpush1.msra.mxu0 %v824
    %902 = vmatprep.subr.mxu0 0.0
    %903 = vmatpush1.msra.mxu0 %v825
    %904 = vmatprep.subr.mxu0 0.0
    %905 = vmatpush1.msra.mxu0 %v826
    %906 = vmatprep.subr.mxu0 0.0
    %907 = vmatpush1.msra.mxu0 %v827
    %908 = vmatprep.subr.mxu0 0.0
    %909 = vmatpush1.msra.mxu0 %v828
    %910 = vmatprep.subr.mxu0 0.0
    %911 = vmatpush1.msra.mxu0 %v829
    %912 = vmatprep.subr.mxu0 0.0
    %913 = vmatpush1.msra.mxu0 %v830
    %914 = vmatprep.subr.mxu0 0.0
    %915 = vmatpush1.msra.mxu0 %v831
    %916 = vmatprep.subr.mxu0 0.0
    %917 = vmatpush1.msra.mxu0 %v832
    %918 = vmatprep.subr.mxu0 0.0
    %919 = vmatpush1.msra.mxu0 %v833
    %920 = vmatprep.subr.mxu0 0.0
    %921 = vmatpush1.msra.mxu0 %v834
    %922 = vmatprep.subr.mxu0 0.0
    %923 = vmatpush1.msra.mxu0 %v835
    %924 = vmatprep.subr.mxu0 0.0
    %925 = vmatpush1.msra.mxu0 %v836
    %926 = vmatprep.subr.mxu0 0.0
    %927 = vmatpush1.msra.mxu0 %v837
    %928 = vmatprep.subr.mxu0 0.0
    %929 = vmatpush1.msra.mxu0 %v838
    %930 = vmatprep.subr.mxu0 0.0
    %931 = vmatpush1.msra.mxu0 %v839
    %932 = vmatprep.subr.mxu0 0.0
    %933 = vmatpush1.msra.mxu0 %v840
    %934 = vmatprep.subr.mxu0 0.0
    %935 = vmatpush1.msra.mxu0 %v841
    %936 = vmatprep.subr.mxu0 0.0
    %937 = vmatpush1.msra.mxu0 %v842
    %938 = vmatprep.subr.mxu0 0.0
    %939 = vmatpush1.msra.mxu0 %v843
    %940 = vmatprep.mubr.f32.mxu0 %v333
    %941 = vmatmul.mubr.f32.gmra.mrb[0].mxu0 %v317
    %v942 = vpop.f32.mrb[0].mxu0
    %v943 = vadd.f32 0.0, %v942
    %v944 = vpop.f32.mrb[0].mxu0
    %945 = vmatprep.mubr.f32.mxu0 %v332
    %946 = vmatmul.mubr.f32.gmra.mrb[0].mxu0 %v318
    %v947 = vpop.f32.mrb[0].mxu0
    %v948 = vadd.f32 0.0, %v947
    %v949 = vpop.f32.mrb[0].mxu0
    %950 = vmatprep.mubr.f32.mxu0 %v331
    %951 = vmatmul.mubr.f32.gmra.mrb[0].mxu0 %v319
    %v952 = vpop.f32.mrb[0].mxu0
    %v953 = vadd.f32 0.0, %v952
    %v954 = vpop.f32.mrb[0].mxu0
    %955 = vdwg.mxu0
    %956 = vmatprep.subr.mxu0 0.0
    %957 = vmatpush1.msra.mxu0 %v844
    %958 = vmatprep.subr.mxu0 0.0
    %959 = vmatpush1.msra.mxu0 %v845
    %960 = vmatprep.subr.mxu0 0.0
    %961 = vmatpush1.msra.mxu0 %v846
    %962 = vmatprep.subr.mxu0 0.0
    %963 = vmatpush1.msra.mxu0 %v847
    %964 = vmatprep.subr.mxu0 0.0
    %965 = vmatpush1.msra.mxu0 %v848
    %966 = vmatprep.subr.mxu0 0.0
    %967 = vmatpush1.msra.mxu0 %v849
    %968 = vmatprep.subr.mxu0 0.0
    %969 = vmatpush1.msra.mxu0 %v850
    %970 = vmatprep.subr.mxu0 0.0
    %971 = vmatpush1.msra.mxu0 %v851
    %972 = vmatprep.subr.mxu0 0.0
    %973 = vmatpush1.msra.mxu0 %v852
    %974 = vmatprep.subr.mxu0 0.0
    %975 = vmatpush1.msra.mxu0 %v853
    %976 = vmatprep.subr.mxu0 0.0
    %977 = vmatpush1.msra.mxu0 %v854
    %978 = vmatprep.subr.mxu0 0.0
    %979 = vmatpush1.msra.mxu0 %v855
    %980 = vmatprep.subr.mxu0 0.0
    %981 = vmatpush1.msra.mxu0 %v856
    %982 = vmatprep.subr.mxu0 0.0
    %983 = vmatpush1.msra.mxu0 %v857
    %984 = vmatprep.subr.mxu0 0.0
    %985 = vmatpush1.msra.mxu0 %v858
    %986 = vmatprep.subr.mxu0 0.0
    %987 = vmatpush1.msra.mxu0 %v859
    %988 = vmatprep.subr.mxu0 0.0
    %989 = vmatpush1.msra.mxu0 %v860
    %990 = vmatprep.subr.mxu0 0.0
    %991 = vmatpush1.msra.mxu0 %v861
    %992 = vmatprep.subr.mxu0 0.0
    %993 = vmatpush1.msra.mxu0 %v862
    %994 = vmatprep.subr.mxu0 0.0
    %995 = vmatpush1.msra.mxu0 %v863
    %996 = vmatprep.subr.mxu0 0.0
    %997 = vmatpush1.msra.mxu0 %v864
    %998 = vmatprep.subr.mxu0 0.0
    %999 = vmatpush1.msra.mxu0 %v865
    %1000 = vmatprep.subr.mxu0 0.0
    %1001 = vmatpush1.msra.mxu0 %v866
    %1002 = vmatprep.subr.mxu0 0.0
    %1003 = vmatpush1.msra.mxu0 %v867
    %1004 = vmatprep.subr.mxu0 0.0
    %1005 = vmatpush1.msra.mxu0 %v868
    %1006 = vmatprep.subr.mxu0 0.0
    %1007 = vmatpush1.msra.mxu0 %v869
    %1008 = vmatprep.subr.mxu0 0.0
    %1009 = vmatpush1.msra.mxu0 %v870
    %1010 = vmatprep.subr.mxu0 0.0
    %1011 = vmatpush1.msra.mxu0 %v871
    %1012 = vmatprep.subr.mxu0 0.0
    %1013 = vmatpush1.msra.mxu0 %v872
    %1014 = vmatprep.subr.mxu0 0.0
    %1015 = vmatpush1.msra.mxu0 %v873
    %1016 = vmatprep.subr.mxu0 0.0
    %1017 = vmatpush1.msra.mxu0 %v874
    %1018 = vmatprep.subr.mxu0 0.0
    %1019 = vmatpush1.msra.mxu0 %v875
    %1020 = vmatprep.mubr.f32.mxu0 %v361
    %1021 = vmatmul.mubr.f32.gmra.mrb[0].mxu0 %v347
    %v1022 = vpop.f32.mrb[0].mxu0
    %v1023 = vadd.f32 %v943, %v1022
    %v1024 = vpop.f32.mrb[0].mxu0
    %1025 = vmatprep.mubr.f32.mxu0 %v360
    %1026 = vmatmul.mubr.f32.gmra.mrb[0].mxu0 %v346
    %v1027 = vpop.f32.mrb[0].mxu0
    %v1028 = vadd.f32 %v948, %v1027
    %v1029 = vpop.f32.mrb[0].mxu0
    %1030 = vmatprep.mubr.f32.mxu0 %v359
    %1031 = vmatmul.mubr.f32.gmra.mrb[0].mxu0 %v345
    %v1032 = vpop.f32.mrb[0].mxu0
    %v1033 = vadd.f32 %v953, %v1032
    %v1034 = vpop.f32.mrb[0].mxu0
    %1035 = vdwg.mxu0
    %v1036 = vadd.f32 %v799, %v1023
    %v1037 = vadd.f32 %v804, %v1028
    %v1038 = vadd.f32 %v809, %v1033
    %v1039 = vld [vmem:[%s3 + $0x600] sm:$0xff]
    %v1040 = vld [vmem:[%s3 + $0x608] sm:$0xff]
    %v1041 = vld [vmem:[%s3 + $0x610] sm:$0xff]
    %v1042 = vld [vmem:[%s3 + $0x618] sm:$0xff]
    %v1043 = vld [vmem:[%s3 + $0x620] sm:$0xff]
    %v1044 = vld [vmem:[%s3 + $0x628] sm:$0xff]
    %v1045 = vld [vmem:[%s3 + $0x630] sm:$0xff]
    %v1046 = vld [vmem:[%s3 + $0x638] sm:$0xff]
    %v1047 = vld [vmem:[%s3 + $0x640] sm:$0xff]
    %v1048 = vld [vmem:[%s3 + $0x648] sm:$0xff]
    %v1049 = vld [vmem:[%s3 + $0x650] sm:$0xff]
    %v1050 = vld [vmem:[%s3 + $0x658] sm:$0xff]
    %v1051 = vld [vmem:[%s3 + $0x660] sm:$0xff]
    %v1052 = vld [vmem:[%s3 + $0x668] sm:$0xff]
    %v1053 = vld [vmem:[%s3 + $0x670] sm:$0xff]
    %v1054 = vld [vmem:[%s3 + $0x678] sm:$0xff]
    %v1055 = vld [vmem:[%s3 + $0x680] sm:$0xff]
    %v1056 = vld [vmem:[%s3 + $0x688] sm:$0xff]
    %v1057 = vld [vmem:[%s3 + $0x690] sm:$0xff]
    %v1058 = vld [vmem:[%s3 + $0x698] sm:$0xff]
    %v1059 = vld [vmem:[%s3 + $0x6a0] sm:$0xff]
    %v1060 = vld [vmem:[%s3 + $0x6a8] sm:$0xff]
    %v1061 = vld [vmem:[%s3 + $0x6b0] sm:$0xff]
    %v1062 = vld [vmem:[%s3 + $0x6b8] sm:$0xff]
    %v1063 = vld [vmem:[%s3 + $0x6c0] sm:$0xff]
    %v1064 = vld [vmem:[%s3 + $0x6c8] sm:$0xff]
    %v1065 = vld [vmem:[%s3 + $0x6d0] sm:$0xff]
    %v1066 = vld [vmem:[%s3 + $0x6d8] sm:$0xff]
    %v1067 = vld [vmem:[%s3 + $0x6e0] sm:$0xff]
    %v1068 = vld [vmem:[%s3 + $0x6e8] sm:$0xff]
    %v1069 = vld [vmem:[%s3 + $0x6f0] sm:$0xff]
    %v1070 = vld [vmem:[%s3 + $0x6f8] sm:$0xff]
    %v1071 = vld [vmem:[%s3 + $0x700] sm:$0xff]
    %v1072 = vld [vmem:[%s3 + $0x708] sm:$0xff]
    %v1073 = vld [vmem:[%s3 + $0x710] sm:$0xff]
    %v1074 = vld [vmem:[%s3 + $0x718] sm:$0xff]
    %v1075 = vld [vmem:[%s3 + $0x720] sm:$0xff]
    %v1076 = vld [vmem:[%s3 + $0x728] sm:$0xff]
    %v1077 = vld [vmem:[%s3 + $0x730] sm:$0xff]
    %v1078 = vld [vmem:[%s3 + $0x738] sm:$0xff]
    %v1079 = vld [vmem:[%s3 + $0x740] sm:$0xff]
    %v1080 = vld [vmem:[%s3 + $0x748] sm:$0xff]
    %v1081 = vld [vmem:[%s3 + $0x750] sm:$0xff]
    %v1082 = vld [vmem:[%s3 + $0x758] sm:$0xff]
    %v1083 = vld [vmem:[%s3 + $0x760] sm:$0xff]
    %v1084 = vld [vmem:[%s3 + $0x768] sm:$0xff]
    %v1085 = vld [vmem:[%s3 + $0x770] sm:$0xff]
    %v1086 = vld [vmem:[%s3 + $0x778] sm:$0xff]
    %v1087 = vld [vmem:[%s3 + $0x780] sm:$0xff]
    %v1088 = vld [vmem:[%s3 + $0x788] sm:$0xff]
    %v1089 = vld [vmem:[%s3 + $0x790] sm:$0xff]
    %v1090 = vld [vmem:[%s3 + $0x798] sm:$0xff]
    %v1091 = vld [vmem:[%s3 + $0x7a0] sm:$0xff]
    %v1092 = vld [vmem:[%s3 + $0x7a8] sm:$0xff]
    %v1093 = vld [vmem:[%s3 + $0x7b0] sm:$0xff]
    %v1094 = vld [vmem:[%s3 + $0x7b8] sm:$0xff]
    %v1095 = vld [vmem:[%s3 + $0x7c0] sm:$0xff]
    %v1096 = vld [vmem:[%s3 + $0x7c8] sm:$0xff]
    %v1097 = vld [vmem:[%s3 + $0x7d0] sm:$0xff]
    %v1098 = vld [vmem:[%s3 + $0x7d8] sm:$0xff]
    %v1099 = vld [vmem:[%s3 + $0x7e0] sm:$0xff]
    %v1100 = vld [vmem:[%s3 + $0x7e8] sm:$0xff]
    %v1101 = vld [vmem:[%s3 + $0x7f0] sm:$0xff]
    %v1102 = vld [vmem:[%s3 + $0x7f8] sm:$0xff]
    %1103 = vmatprep.subr.mxu0 0.0
    %1104 = vmatpush1.msra.mxu0 %v1039
    %1105 = vmatprep.subr.mxu0 0.0
    %1106 = vmatpush1.msra.mxu0 %v1040
    %1107 = vmatprep.subr.mxu0 0.0
    %1108 = vmatpush1.msra.mxu0 %v1041
    %1109 = vmatprep.subr.mxu0 0.0
    %1110 = vmatpush1.msra.mxu0 %v1042
    %1111 = vmatprep.subr.mxu0 0.0
    %1112 = vmatpush1.msra.mxu0 %v1043
    %1113 = vmatprep.subr.mxu0 0.0
    %1114 = vmatpush1.msra.mxu0 %v1044
    %1115 = vmatprep.subr.mxu0 0.0
    %1116 = vmatpush1.msra.mxu0 %v1045
    %1117 = vmatprep.subr.mxu0 0.0
    %1118 = vmatpush1.msra.mxu0 %v1046
    %1119 = vmatprep.subr.mxu0 0.0
    %1120 = vmatpush1.msra.mxu0 %v1047
    %1121 = vmatprep.subr.mxu0 0.0
    %1122 = vmatpush1.msra.mxu0 %v1048
    %1123 = vmatprep.subr.mxu0 0.0
    %1124 = vmatpush1.msra.mxu0 %v1049
    %1125 = vmatprep.subr.mxu0 0.0
    %1126 = vmatpush1.msra.mxu0 %v1050
    %1127 = vmatprep.subr.mxu0 0.0
    %1128 = vmatpush1.msra.mxu0 %v1051
    %1129 = vmatprep.subr.mxu0 0.0
    %1130 = vmatpush1.msra.mxu0 %v1052
    %1131 = vmatprep.subr.mxu0 0.0
    %1132 = vmatpush1.msra.mxu0 %v1053
    %1133 = vmatprep.subr.mxu0 0.0
    %1134 = vmatpush1.msra.mxu0 %v1054
    %1135 = vmatprep.subr.mxu0 0.0
    %1136 = vmatpush1.msra.mxu0 %v1055
    %1137 = vmatprep.subr.mxu0 0.0
    %1138 = vmatpush1.msra.mxu0 %v1056
    %1139 = vmatprep.subr.mxu0 0.0
    %1140 = vmatpush1.msra.mxu0 %v1057
    %1141 = vmatprep.subr.mxu0 0.0
    %1142 = vmatpush1.msra.mxu0 %v1058
    %1143 = vmatprep.subr.mxu0 0.0
    %1144 = vmatpush1.msra.mxu0 %v1059
    %1145 = vmatprep.subr.mxu0 0.0
    %1146 = vmatpush1.msra.mxu0 %v1060
    %1147 = vmatprep.subr.mxu0 0.0
    %1148 = vmatpush1.msra.mxu0 %v1061
    %1149 = vmatprep.subr.mxu0 0.0
    %1150 = vmatpush1.msra.mxu0 %v1062
    %1151 = vmatprep.subr.mxu0 0.0
    %1152 = vmatpush1.msra.mxu0 %v1063
    %1153 = vmatprep.subr.mxu0 0.0
    %1154 = vmatpush1.msra.mxu0 %v1064
    %1155 = vmatprep.subr.mxu0 0.0
    %1156 = vmatpush1.msra.mxu0 %v1065
    %1157 = vmatprep.subr.mxu0 0.0
    %1158 = vmatpush1.msra.mxu0 %v1066
    %1159 = vmatprep.subr.mxu0 0.0
    %1160 = vmatpush1.msra.mxu0 %v1067
    %1161 = vmatprep.subr.mxu0 0.0
    %1162 = vmatpush1.msra.mxu0 %v1068
    %1163 = vmatprep.subr.mxu0 0.0
    %1164 = vmatpush1.msra.mxu0 %v1069
    %1165 = vmatprep.subr.mxu0 0.0
    %1166 = vmatpush1.msra.mxu0 %v1070
    %1167 = vmatprep.mubr.f32.mxu0 %v332
    %1168 = vmatmul.mubr.f32.gmra.mrb[0].mxu0 %v318
    %v1169 = vpop.f32.mrb[0].mxu0
    %v1170 = vadd.f32 0.0, %v1169
    %v1171 = vpop.f32.mrb[0].mxu0
    %1172 = vmatprep.mubr.f32.mxu0 %v331
    %1173 = vmatmul.mubr.f32.gmra.mrb[0].mxu0 %v319
    %v1174 = vpop.f32.mrb[0].mxu0
    %v1175 = vadd.f32 0.0, %v1174
    %v1176 = vpop.f32.mrb[0].mxu0
    %1177 = vmatprep.mubr.f32.mxu0 %v330
    %1178 = vmatmul.mubr.f32.gmra.mrb[0].mxu0 %v320
    %v1179 = vpop.f32.mrb[0].mxu0
    %v1180 = vadd.f32 0.0, %v1179
    %v1181 = vpop.f32.mrb[0].mxu0
    %1182 = vdwg.mxu0
    %1183 = vmatprep.subr.mxu0 0.0
    %1184 = vmatpush1.msra.mxu0 %v1071
    %1185 = vmatprep.subr.mxu0 0.0
    %1186 = vmatpush1.msra.mxu0 %v1072
    %1187 = vmatprep.subr.mxu0 0.0
    %1188 = vmatpush1.msra.mxu0 %v1073
    %1189 = vmatprep.subr.mxu0 0.0
    %1190 = vmatpush1.msra.mxu0 %v1074
    %1191 = vmatprep.subr.mxu0 0.0
    %1192 = vmatpush1.msra.mxu0 %v1075
    %1193 = vmatprep.subr.mxu0 0.0
    %1194 = vmatpush1.msra.mxu0 %v1076
    %1195 = vmatprep.subr.mxu0 0.0
    %1196 = vmatpush1.msra.mxu0 %v1077
    %1197 = vmatprep.subr.mxu0 0.0
    %1198 = vmatpush1.msra.mxu0 %v1078
    %1199 = vmatprep.subr.mxu0 0.0
    %1200 = vmatpush1.msra.mxu0 %v1079
    %1201 = vmatprep.subr.mxu0 0.0
    %1202 = vmatpush1.msra.mxu0 %v1080
    %1203 = vmatprep.subr.mxu0 0.0
    %1204 = vmatpush1.msra.mxu0 %v1081
    %1205 = vmatprep.subr.mxu0 0.0
    %1206 = vmatpush1.msra.mxu0 %v1082
    %1207 = vmatprep.subr.mxu0 0.0
    %1208 = vmatpush1.msra.mxu0 %v1083
    %1209 = vmatprep.subr.mxu0 0.0
    %1210 = vmatpush1.msra.mxu0 %v1084
    %1211 = vmatprep.subr.mxu0 0.0
    %1212 = vmatpush1.msra.mxu0 %v1085
    %1213 = vmatprep.subr.mxu0 0.0
    %1214 = vmatpush1.msra.mxu0 %v1086
    %1215 = vmatprep.subr.mxu0 0.0
    %1216 = vmatpush1.msra.mxu0 %v1087
    %1217 = vmatprep.subr.mxu0 0.0
    %1218 = vmatpush1.msra.mxu0 %v1088
    %1219 = vmatprep.subr.mxu0 0.0
    %1220 = vmatpush1.msra.mxu0 %v1089
    %1221 = vmatprep.subr.mxu0 0.0
    %1222 = vmatpush1.msra.mxu0 %v1090
    %1223 = vmatprep.subr.mxu0 0.0
    %1224 = vmatpush1.msra.mxu0 %v1091
    %1225 = vmatprep.subr.mxu0 0.0
    %1226 = vmatpush1.msra.mxu0 %v1092
    %1227 = vmatprep.subr.mxu0 0.0
    %1228 = vmatpush1.msra.mxu0 %v1093
    %1229 = vmatprep.subr.mxu0 0.0
    %1230 = vmatpush1.msra.mxu0 %v1094
    %1231 = vmatprep.subr.mxu0 0.0
    %1232 = vmatpush1.msra.mxu0 %v1095
    %1233 = vmatprep.subr.mxu0 0.0
    %1234 = vmatpush1.msra.mxu0 %v1096
    %1235 = vmatprep.subr.mxu0 0.0
    %1236 = vmatpush1.msra.mxu0 %v1097
    %1237 = vmatprep.subr.mxu0 0.0
    %1238 = vmatpush1.msra.mxu0 %v1098
    %1239 = vmatprep.subr.mxu0 0.0
    %1240 = vmatpush1.msra.mxu0 %v1099
    %1241 = vmatprep.subr.mxu0 0.0
    %1242 = vmatpush1.msra.mxu0 %v1100
    %1243 = vmatprep.subr.mxu0 0.0
    %1244 = vmatpush1.msra.mxu0 %v1101
    %1245 = vmatprep.subr.mxu0 0.0
    %1246 = vmatpush1.msra.mxu0 %v1102
    %1247 = vmatprep.mubr.f32.mxu0 %v360
    %1248 = vmatmul.mubr.f32.gmra.mrb[0].mxu0 %v346
    %v1249 = vpop.f32.mrb[0].mxu0
    %v1250 = vadd.f32 %v1170, %v1249
    %v1251 = vpop.f32.mrb[0].mxu0
    %1252 = vmatprep.mubr.f32.mxu0 %v359
    %1253 = vmatmul.mubr.f32.gmra.mrb[0].mxu0 %v345
    %v1254 = vpop.f32.mrb[0].mxu0
    %v1255 = vadd.f32 %v1175, %v1254
    %v1256 = vpop.f32.mrb[0].mxu0
    %1257 = vmatprep.mubr.f32.mxu0 %v358
    %1258 = vmatmul.mubr.f32.gmra.mrb[0].mxu0 %v344
    %v1259 = vpop.f32.mrb[0].mxu0
    %v1260 = vadd.f32 %v1180, %v1259
    %v1261 = vpop.f32.mrb[0].mxu0
    %1262 = vdwg.mxu0
    %v1263 = vadd.f32 %v1036, %v1250
    %v1264 = vadd.f32 %v1037, %v1255
    %v1265 = vadd.f32 %v1038, %v1260
    %v1266 = vld [vmem:[%s4] sm:$0x1]
    %v1268 = vlaneseq
    %v1269 = vshrl.u32 %v1268, 7
    %v1270 = vsub.s32 0, %v1269
    %v1271 = vrot.slane %v1266, %v1270
    %v1273 = vadd.f32 %v1263, %v1271
    %v1274 = vadd.f32 %v1264, %v1271
    %v1275 = vadd.f32 %v1265, %v1271
    %vm1276 = vcmp.gt.f32.partialorder %v1273, 0.0
    %vm1277 = vcmp.gt.f32.partialorder %v1274, 0.0
    %vm1278 = vcmp.gt.f32.partialorder %v1275, 0.0
    %v1279 = vmul.f32 %v1273, 0.01
    %v1280 = vmul.f32 %v1274, 0.01
    %v1281 = vmul.f32 %v1275, 0.01
    %v1282 = vsel %vm1276, %v1273, %v1279
    %v1283 = vsel %vm1277, %v1274, %v1280
    %v1284 = vsel %vm1278, %v1275, %v1281
    %v1285 = vld [vmem:[%s5] sm:$0xff]
    %v1286 = vld [vmem:[%s5 + $0x8] sm:$0xff]
    %vm1287 = vcmask 195584
    %v1289 = vsel %vm1287, %v1285, 0
    %v1292 = vsel %vm1287, %v1286, 0
    %1294 = vmatprep.subr.mxu0 0.0
    %1295 = vmatpush1.msra.mxu0 %v1282
    %1296 = vmatprep.subr.mxu0 0.0
    %1297 = vmatpush1.msra.mxu0 %v1283
    %1298 = vmatprep.subr.mxu0 0.0
    %1299 = vmatpush1.msra.mxu0 %v1284
    %1300 = vmatprep.subr.mxu0 0.0
    %1301 = vmatpush1.msra.mxu0 0.0
    %1302 = vmatprep.subr.mxu0 0.0
    %1303 = vmatpush1.msra.mxu0 0.0
    %1304 = vmatprep.subr.mxu0 0.0
    %1305 = vmatpush1.msra.mxu0 0.0
    %1306 = vmatprep.subr.mxu0 0.0
    %1307 = vmatpush1.msra.mxu0 0.0
    %1308 = vmatprep.subr.mxu0 0.0
    %1309 = vmatpush1.msra.mxu0 0.0
    %1310 = vmatprep.subr.mxu0 0.0
    %1311 = vmatpush1.msra.mxu0 0.0
    %1312 = vmatprep.subr.mxu0 0.0
    %1313 = vmatpush1.msra.mxu0 0.0
    %1314 = vmatprep.subr.mxu0 0.0
    %1315 = vmatpush1.msra.mxu0 0.0
    %1316 = vmatprep.subr.mxu0 0.0
    %1317 = vmatpush1.msra.mxu0 0.0
    %1318 = vmatprep.subr.mxu0 0.0
    %1319 = vmatpush1.msra.mxu0 0.0
    %1320 = vmatprep.subr.mxu0 0.0
    %1321 = vmatpush1.msra.mxu0 0.0
    %1322 = vmatprep.subr.mxu0 0.0
    %1323 = vmatpush1.msra.mxu0 0.0
    %1324 = vmatprep.subr.mxu0 0.0
    %1325 = vmatpush1.msra.mxu0 0.0
    %1326 = vmatprep.subr.mxu0 0.0
    %1327 = vmatpush1.msra.mxu0 0.0
    %1328 = vmatprep.subr.mxu0 0.0
    %1329 = vmatpush1.msra.mxu0 0.0
    %1330 = vmatprep.subr.mxu0 0.0
    %1331 = vmatpush1.msra.mxu0 0.0
    %1332 = vmatprep.subr.mxu0 0.0
    %1333 = vmatpush1.msra.mxu0 0.0
    %1334 = vmatprep.subr.mxu0 0.0
    %1335 = vmatpush1.msra.mxu0 0.0
    %1336 = vmatprep.subr.mxu0 0.0
    %1337 = vmatpush1.msra.mxu0 0.0
    %1338 = vmatprep.subr.mxu0 0.0
    %1339 = vmatpush1.msra.mxu0 0.0
    %1340 = vmatprep.subr.mxu0 0.0
    %1341 = vmatpush1.msra.mxu0 0.0
    %1342 = vmatprep.subr.mxu0 0.0
    %1343 = vmatpush1.msra.mxu0 0.0
    %1344 = vmatprep.subr.mxu0 0.0
    %1345 = vmatpush1.msra.mxu0 0.0
    %1346 = vmatprep.subr.mxu0 0.0
    %1347 = vmatpush1.msra.mxu0 0.0
    %1348 = vmatprep.subr.mxu0 0.0
    %1349 = vmatpush1.msra.mxu0 0.0
    %1350 = vmatprep.subr.mxu0 0.0
    %1351 = vmatpush1.msra.mxu0 0.0
    %1352 = vmatprep.subr.mxu0 0.0
    %1353 = vmatpush1.msra.mxu0 0.0
    %1354 = vmatprep.subr.mxu0 0.0
    %1355 = vmatpush1.msra.mxu0 0.0
    %1356 = vmatprep.subr.mxu0 0.0
    %1357 = vmatpush1.msra.mxu0 0.0
    %1358 = vmatprep.mubr.f32.mxu0 0.0
    %1359 = vmatmul.mubr.f32.gmra.mrb[0].mxu0 %v1289
    %v1360 = vpop.f32.mrb[0].mxu0
    %v1361 = vadd.f32 0.0, %v1360
    %v1362 = vpop.f32.mrb[0].mxu0
    %1363 = vmatprep.mubr.f32.mxu0 0.0
    %1364 = vmatmul.mubr.f32.gmra.mrb[0].mxu0 %v1292
    %v1365 = vpop.f32.mrb[0].mxu0
    %v1366 = vadd.f32 0.0, %v1365
    %v1367 = vpop.f32.mrb[0].mxu0
    %1368 = vdwg.mxu0
    %1369 = vst.msk [vmem:[#allocation2] sm:$0xff] %vm314, %v1361
    %1370 = vst.msk [vmem:[#allocation2 + $0x8] sm:$0xff] %vm314, %v1366
    %v1371 = vrot.slane %v262, 1
    %v1372 = vrot.slane %v263, 1
    %v1373 = vrot.slane %v264, 1
    %v1374 = vrot.slane %v265, 1
    %v1375 = vrot.slane %v266, 1
    %v1376 = vrot.slane %v267, 1
    %v1377 = vrot.slane %v268, 1
    %v1378 = vsel %vm278, %v1376, %v1377
    %v1379 = vsel %vm278, %v1375, %v1376
    %v1380 = vsel %vm278, %v1374, %v1375
    %v1381 = vsel %vm278, %v1373, %v1374
    %v1382 = vsel %vm278, %v1372, %v1373
    %v1383 = vsel %vm278, %v1371, %v1372
    %v1384 = vsel %vm278, %v1377, %v1371
    %1392 = vrot.lane.b32.xlu0 %v1383, 64
    %v1393 = vpop.permute.xlu0 %1392
    %1394 = vrot.lane.b32.xlu0 %v1382, 64
    %v1395 = vpop.permute.xlu0 %1394
    %1396 = vrot.lane.b32.xlu0 %v1381, 64
    %v1397 = vpop.permute.xlu0 %1396
    %1398 = vrot.lane.b32.xlu0 %v1380, 64
    %v1399 = vpop.permute.xlu0 %1398
    %1400 = vrot.lane.b32.xlu0 %v1379, 64
    %v1401 = vpop.permute.xlu0 %1400
    %1402 = vrot.lane.b32.xlu0 %v1378, 64
    %v1403 = vpop.permute.xlu0 %1402
    %1404 = vrot.lane.b32.xlu0 %v1384, 64
    %v1405 = vpop.permute.xlu0 %1404
    %v1413 = vsel %vm314, %v262, %v1393
    %v1414 = vsel %vm314, %v263, %v1395
    %v1415 = vsel %vm314, %v264, %v1397
    %v1416 = vsel %vm314, %v265, %v1399
    %v1417 = vsel %vm314, %v266, %v1401
    %v1418 = vsel %vm314, %v267, %v1403
    %v1419 = vsel %vm314, %v268, %v1405
    %v1420 = vrot.slane %v1413, 2
    %v1421 = vrot.slane %v1414, 2
    %v1422 = vrot.slane %v1415, 2
    %v1423 = vrot.slane %v1416, 2
    %v1424 = vrot.slane %v1417, 2
    %v1425 = vrot.slane %v1418, 2
    %v1426 = vrot.slane %v1419, 2
    %v1427 = vsel %vm329, %v1425, %v1426
    %v1428 = vsel %vm329, %v1424, %v1425
    %v1429 = vsel %vm329, %v1423, %v1424
    %v1430 = vsel %vm329, %v1422, %v1423
    %v1431 = vsel %vm329, %v1421, %v1422
    %v1432 = vsel %vm329, %v1420, %v1421
    %v1433 = vrot.slane %v1413, 4
    %v1434 = vrot.slane %v1414, 4
    %v1435 = vrot.slane %v1415, 4
    %v1436 = vrot.slane %v1416, 4
    %v1437 = vrot.slane %v1417, 4
    %v1438 = vrot.slane %v1418, 4
    %v1439 = vrot.slane %v1419, 4
    %v1440 = vsel %vm343, %v1438, %v1439
    %v1441 = vsel %vm343, %v1437, %v1438
    %v1442 = vsel %vm343, %v1436, %v1437
    %v1443 = vsel %vm343, %v1435, %v1436
    %v1444 = vsel %vm343, %v1434, %v1435
    %v1445 = vsel %vm343, %v1433, %v1434
    %v1446 = vrot.slane %v1413, 6
    %v1447 = vrot.slane %v1414, 6
    %v1448 = vrot.slane %v1415, 6
    %v1449 = vrot.slane %v1416, 6
    %v1450 = vrot.slane %v1417, 6
    %v1451 = vrot.slane %v1418, 6
    %v1452 = vrot.slane %v1419, 6
    %v1453 = vsel %vm357, %v1451, %v1452
    %v1454 = vsel %vm357, %v1450, %v1451
    %v1455 = vsel %vm357, %v1449, %v1450
    %v1456 = vsel %vm357, %v1448, %v1449
    %v1457 = vsel %vm357, %v1447, %v1448
    %v1458 = vsel %vm357, %v1446, %v1447
    %v1459 = vld [vmem:[%s3] sm:$0xff]
    %v1460 = vld [vmem:[%s3 + $0x8] sm:$0xff]
    %v1461 = vld [vmem:[%s3 + $0x10] sm:$0xff]
    %v1462 = vld [vmem:[%s3 + $0x18] sm:$0xff]
    %v1463 = vld [vmem:[%s3 + $0x20] sm:$0xff]
    %v1464 = vld [vmem:[%s3 + $0x28] sm:$0xff]
    %v1465 = vld [vmem:[%s3 + $0x30] sm:$0xff]
    %v1466 = vld [vmem:[%s3 + $0x38] sm:$0xff]
    %v1467 = vld [vmem:[%s3 + $0x40] sm:$0xff]
    %v1468 = vld [vmem:[%s3 + $0x48] sm:$0xff]
    %v1469 = vld [vmem:[%s3 + $0x50] sm:$0xff]
    %v1470 = vld [vmem:[%s3 + $0x58] sm:$0xff]
    %v1471 = vld [vmem:[%s3 + $0x60] sm:$0xff]
    %v1472 = vld [vmem:[%s3 + $0x68] sm:$0xff]
    %v1473 = vld [vmem:[%s3 + $0x70] sm:$0xff]
    %v1474 = vld [vmem:[%s3 + $0x78] sm:$0xff]
    %v1475 = vld [vmem:[%s3 + $0x80] sm:$0xff]
    %v1476 = vld [vmem:[%s3 + $0x88] sm:$0xff]
    %v1477 = vld [vmem:[%s3 + $0x90] sm:$0xff]
    %v1478 = vld [vmem:[%s3 + $0x98] sm:$0xff]
    %v1479 = vld [vmem:[%s3 + $0xa0] sm:$0xff]
    %v1480 = vld [vmem:[%s3 + $0xa8] sm:$0xff]
    %v1481 = vld [vmem:[%s3 + $0xb0] sm:$0xff]
    %v1482 = vld [vmem:[%s3 + $0xb8] sm:$0xff]
    %v1483 = vld [vmem:[%s3 + $0xc0] sm:$0xff]
    %v1484 = vld [vmem:[%s3 + $0xc8] sm:$0xff]
    %v1485 = vld [vmem:[%s3 + $0xd0] sm:$0xff]
    %v1486 = vld [vmem:[%s3 + $0xd8] sm:$0xff]
    %v1487 = vld [vmem:[%s3 + $0xe0] sm:$0xff]
    %v1488 = vld [vmem:[%s3 + $0xe8] sm:$0xff]
    %v1489 = vld [vmem:[%s3 + $0xf0] sm:$0xff]
    %v1490 = vld [vmem:[%s3 + $0xf8] sm:$0xff]
    %v1491 = vld [vmem:[%s3 + $0x100] sm:$0xff]
    %v1492 = vld [vmem:[%s3 + $0x108] sm:$0xff]
    %v1493 = vld [vmem:[%s3 + $0x110] sm:$0xff]
    %v1494 = vld [vmem:[%s3 + $0x118] sm:$0xff]
    %v1495 = vld [vmem:[%s3 + $0x120] sm:$0xff]
    %v1496 = vld [vmem:[%s3 + $0x128] sm:$0xff]
    %v1497 = vld [vmem:[%s3 + $0x130] sm:$0xff]
    %v1498 = vld [vmem:[%s3 + $0x138] sm:$0xff]
    %v1499 = vld [vmem:[%s3 + $0x140] sm:$0xff]
    %v1500 = vld [vmem:[%s3 + $0x148] sm:$0xff]
    %v1501 = vld [vmem:[%s3 + $0x150] sm:$0xff]
    %v1502 = vld [vmem:[%s3 + $0x158] sm:$0xff]
    %v1503 = vld [vmem:[%s3 + $0x160] sm:$0xff]
    %v1504 = vld [vmem:[%s3 + $0x168] sm:$0xff]
    %v1505 = vld [vmem:[%s3 + $0x170] sm:$0xff]
    %v1506 = vld [vmem:[%s3 + $0x178] sm:$0xff]
    %v1507 = vld [vmem:[%s3 + $0x180] sm:$0xff]
    %v1508 = vld [vmem:[%s3 + $0x188] sm:$0xff]
    %v1509 = vld [vmem:[%s3 + $0x190] sm:$0xff]
    %v1510 = vld [vmem:[%s3 + $0x198] sm:$0xff]
    %v1511 = vld [vmem:[%s3 + $0x1a0] sm:$0xff]
    %v1512 = vld [vmem:[%s3 + $0x1a8] sm:$0xff]
    %v1513 = vld [vmem:[%s3 + $0x1b0] sm:$0xff]
    %v1514 = vld [vmem:[%s3 + $0x1b8] sm:$0xff]
    %v1515 = vld [vmem:[%s3 + $0x1c0] sm:$0xff]
    %v1516 = vld [vmem:[%s3 + $0x1c8] sm:$0xff]
    %v1517 = vld [vmem:[%s3 + $0x1d0] sm:$0xff]
    %v1518 = vld [vmem:[%s3 + $0x1d8] sm:$0xff]
    %v1519 = vld [vmem:[%s3 + $0x1e0] sm:$0xff]
    %v1520 = vld [vmem:[%s3 + $0x1e8] sm:$0xff]
    %v1521 = vld [vmem:[%s3 + $0x1f0] sm:$0xff]
    %v1522 = vld [vmem:[%s3 + $0x1f8] sm:$0xff]
    %v1523 = vld [vmem:[%s3 + $0x200] sm:$0xff]
    %v1524 = vld [vmem:[%s3 + $0x208] sm:$0xff]
    %v1525 = vld [vmem:[%s3 + $0x210] sm:$0xff]
    %v1526 = vld [vmem:[%s3 + $0x218] sm:$0xff]
    %v1527 = vld [vmem:[%s3 + $0x220] sm:$0xff]
    %v1528 = vld [vmem:[%s3 + $0x228] sm:$0xff]
    %v1529 = vld [vmem:[%s3 + $0x230] sm:$0xff]
    %v1530 = vld [vmem:[%s3 + $0x238] sm:$0xff]
    %v1531 = vld [vmem:[%s3 + $0x240] sm:$0xff]
    %v1532 = vld [vmem:[%s3 + $0x248] sm:$0xff]
    %v1533 = vld [vmem:[%s3 + $0x250] sm:$0xff]
    %v1534 = vld [vmem:[%s3 + $0x258] sm:$0xff]
    %v1535 = vld [vmem:[%s3 + $0x260] sm:$0xff]
    %v1536 = vld [vmem:[%s3 + $0x268] sm:$0xff]
    %v1537 = vld [vmem:[%s3 + $0x270] sm:$0xff]
    %v1538 = vld [vmem:[%s3 + $0x278] sm:$0xff]
    %v1539 = vld [vmem:[%s3 + $0x280] sm:$0xff]
    %v1540 = vld [vmem:[%s3 + $0x288] sm:$0xff]
    %v1541 = vld [vmem:[%s3 + $0x290] sm:$0xff]
    %v1542 = vld [vmem:[%s3 + $0x298] sm:$0xff]
    %v1543 = vld [vmem:[%s3 + $0x2a0] sm:$0xff]
    %v1544 = vld [vmem:[%s3 + $0x2a8] sm:$0xff]
    %v1545 = vld [vmem:[%s3 + $0x2b0] sm:$0xff]
    %v1546 = vld [vmem:[%s3 + $0x2b8] sm:$0xff]
    %v1547 = vld [vmem:[%s3 + $0x2c0] sm:$0xff]
    %v1548 = vld [vmem:[%s3 + $0x2c8] sm:$0xff]
    %v1549 = vld [vmem:[%s3 + $0x2d0] sm:$0xff]
    %v1550 = vld [vmem:[%s3 + $0x2d8] sm:$0xff]
    %v1551 = vld [vmem:[%s3 + $0x2e0] sm:$0xff]
    %v1552 = vld [vmem:[%s3 + $0x2e8] sm:$0xff]
    %v1553 = vld [vmem:[%s3 + $0x2f0] sm:$0xff]
    %v1554 = vld [vmem:[%s3 + $0x2f8] sm:$0xff]
    %v1555 = vld [vmem:[%s3 + $0x300] sm:$0xff]
    %v1556 = vld [vmem:[%s3 + $0x308] sm:$0xff]
    %v1557 = vld [vmem:[%s3 + $0x310] sm:$0xff]
    %v1558 = vld [vmem:[%s3 + $0x318] sm:$0xff]
    %v1559 = vld [vmem:[%s3 + $0x320] sm:$0xff]
    %v1560 = vld [vmem:[%s3 + $0x328] sm:$0xff]
    %v1561 = vld [vmem:[%s3 + $0x330] sm:$0xff]
    %v1562 = vld [vmem:[%s3 + $0x338] sm:$0xff]
    %v1563 = vld [vmem:[%s3 + $0x340] sm:$0xff]
    %v1564 = vld [vmem:[%s3 + $0x348] sm:$0xff]
    %v1565 = vld [vmem:[%s3 + $0x350] sm:$0xff]
    %v1566 = vld [vmem:[%s3 + $0x358] sm:$0xff]
    %v1567 = vld [vmem:[%s3 + $0x360] sm:$0xff]
    %v1568 = vld [vmem:[%s3 + $0x368] sm:$0xff]
    %v1569 = vld [vmem:[%s3 + $0x370] sm:$0xff]
    %v1570 = vld [vmem:[%s3 + $0x378] sm:$0xff]
    %v1571 = vld [vmem:[%s3 + $0x380] sm:$0xff]
    %v1572 = vld [vmem:[%s3 + $0x388] sm:$0xff]
    %v1573 = vld [vmem:[%s3 + $0x390] sm:$0xff]
    %v1574 = vld [vmem:[%s3 + $0x398] sm:$0xff]
    %v1575 = vld [vmem:[%s3 + $0x3a0] sm:$0xff]
    %v1576 = vld [vmem:[%s3 + $0x3a8] sm:$0xff]
    %v1577 = vld [vmem:[%s3 + $0x3b0] sm:$0xff]
    %v1578 = vld [vmem:[%s3 + $0x3b8] sm:$0xff]
    %v1579 = vld [vmem:[%s3 + $0x3c0] sm:$0xff]
    %v1580 = vld [vmem:[%s3 + $0x3c8] sm:$0xff]
    %v1581 = vld [vmem:[%s3 + $0x3d0] sm:$0xff]
    %v1582 = vld [vmem:[%s3 + $0x3d8] sm:$0xff]
    %v1583 = vld [vmem:[%s3 + $0x3e0] sm:$0xff]
    %v1584 = vld [vmem:[%s3 + $0x3e8] sm:$0xff]
    %v1585 = vld [vmem:[%s3 + $0x3f0] sm:$0xff]
    %v1586 = vld [vmem:[%s3 + $0x3f8] sm:$0xff]
    %1587 = vmatprep.subr.mxu0 0.0
    %1588 = vmatpush1.msra.mxu0 %v1523
    %1589 = vmatprep.subr.mxu0 0.0
    %1590 = vmatpush1.msra.mxu0 %v1524
    %1591 = vmatprep.subr.mxu0 0.0
    %1592 = vmatpush1.msra.mxu0 %v1525
    %1593 = vmatprep.subr.mxu0 0.0
    %1594 = vmatpush1.msra.mxu0 %v1526
    %1595 = vmatprep.subr.mxu0 0.0
    %1596 = vmatpush1.msra.mxu0 %v1527
    %1597 = vmatprep.subr.mxu0 0.0
    %1598 = vmatpush1.msra.mxu0 %v1528
    %1599 = vmatprep.subr.mxu0 0.0
    %1600 = vmatpush1.msra.mxu0 %v1529
    %1601 = vmatprep.subr.mxu0 0.0
    %1602 = vmatpush1.msra.mxu0 %v1530
    %1603 = vmatprep.subr.mxu0 0.0
    %1604 = vmatpush1.msra.mxu0 %v1531
    %1605 = vmatprep.subr.mxu0 0.0
    %1606 = vmatpush1.msra.mxu0 %v1532
    %1607 = vmatprep.subr.mxu0 0.0
    %1608 = vmatpush1.msra.mxu0 %v1533
    %1609 = vmatprep.subr.mxu0 0.0
    %1610 = vmatpush1.msra.mxu0 %v1534
    %1611 = vmatprep.subr.mxu0 0.0
    %1612 = vmatpush1.msra.mxu0 %v1535
    %1613 = vmatprep.subr.mxu0 0.0
    %1614 = vmatpush1.msra.mxu0 %v1536
    %1615 = vmatprep.subr.mxu0 0.0
    %1616 = vmatpush1.msra.mxu0 %v1537
    %1617 = vmatprep.subr.mxu0 0.0
    %1618 = vmatpush1.msra.mxu0 %v1538
    %1619 = vmatprep.subr.mxu0 0.0
    %1620 = vmatpush1.msra.mxu0 %v1539
    %1621 = vmatprep.subr.mxu0 0.0
    %1622 = vmatpush1.msra.mxu0 %v1540
    %1623 = vmatprep.subr.mxu0 0.0
    %1624 = vmatpush1.msra.mxu0 %v1541
    %1625 = vmatprep.subr.mxu0 0.0
    %1626 = vmatpush1.msra.mxu0 %v1542
    %1627 = vmatprep.subr.mxu0 0.0
    %1628 = vmatpush1.msra.mxu0 %v1543
    %1629 = vmatprep.subr.mxu0 0.0
    %1630 = vmatpush1.msra.mxu0 %v1544
    %1631 = vmatprep.subr.mxu0 0.0
    %1632 = vmatpush1.msra.mxu0 %v1545
    %1633 = vmatprep.subr.mxu0 0.0
    %1634 = vmatpush1.msra.mxu0 %v1546
    %1635 = vmatprep.subr.mxu0 0.0
    %1636 = vmatpush1.msra.mxu0 %v1547
    %1637 = vmatprep.subr.mxu0 0.0
    %1638 = vmatpush1.msra.mxu0 %v1548
    %1639 = vmatprep.subr.mxu0 0.0
    %1640 = vmatpush1.msra.mxu0 %v1549
    %1641 = vmatprep.subr.mxu0 0.0
    %1642 = vmatpush1.msra.mxu0 %v1550
    %1643 = vmatprep.subr.mxu0 0.0
    %1644 = vmatpush1.msra.mxu0 %v1551
    %1645 = vmatprep.subr.mxu0 0.0
    %1646 = vmatpush1.msra.mxu0 %v1552
    %1647 = vmatprep.subr.mxu0 0.0
    %1648 = vmatpush1.msra.mxu0 %v1553
    %1649 = vmatprep.subr.mxu0 0.0
    %1650 = vmatpush1.msra.mxu0 %v1554
    %1651 = vmatprep.mubr.f32.mxu0 %v1431
    %1652 = vmatmul.mubr.f32.gmra.mrb[0].mxu0 %v1414
    %v1653 = vpop.f32.mrb[0].mxu0
    %v1654 = vadd.f32 0.0, %v1653
    %v1655 = vpop.f32.mrb[0].mxu0
    %1656 = vmatprep.mubr.f32.mxu0 %v1430
    %1657 = vmatmul.mubr.f32.gmra.mrb[0].mxu0 %v1415
    %v1658 = vpop.f32.mrb[0].mxu0
    %v1659 = vadd.f32 0.0, %v1658
    %v1660 = vpop.f32.mrb[0].mxu0
    %1661 = vmatprep.mubr.f32.mxu0 %v1429
    %1662 = vmatmul.mubr.f32.gmra.mrb[0].mxu0 %v1416
    %v1663 = vpop.f32.mrb[0].mxu0
    %v1664 = vadd.f32 0.0, %v1663
    %v1665 = vpop.f32.mrb[0].mxu0
    %1666 = vdwg.mxu0
    %1667 = vmatprep.subr.mxu0 0.0
    %1668 = vmatpush1.msra.mxu0 %v1555
    %1669 = vmatprep.subr.mxu0 0.0
    %1670 = vmatpush1.msra.mxu0 %v1556
    %1671 = vmatprep.subr.mxu0 0.0
    %1672 = vmatpush1.msra.mxu0 %v1557
    %1673 = vmatprep.subr.mxu0 0.0
    %1674 = vmatpush1.msra.mxu0 %v1558
    %1675 = vmatprep.subr.mxu0 0.0
    %1676 = vmatpush1.msra.mxu0 %v1559
    %1677 = vmatprep.subr.mxu0 0.0
    %1678 = vmatpush1.msra.mxu0 %v1560
    %1679 = vmatprep.subr.mxu0 0.0
    %1680 = vmatpush1.msra.mxu0 %v1561
    %1681 = vmatprep.subr.mxu0 0.0
    %1682 = vmatpush1.msra.mxu0 %v1562
    %1683 = vmatprep.subr.mxu0 0.0
    %1684 = vmatpush1.msra.mxu0 %v1563
    %1685 = vmatprep.subr.mxu0 0.0
    %1686 = vmatpush1.msra.mxu0 %v1564
    %1687 = vmatprep.subr.mxu0 0.0
    %1688 = vmatpush1.msra.mxu0 %v1565
    %1689 = vmatprep.subr.mxu0 0.0
    %1690 = vmatpush1.msra.mxu0 %v1566
    %1691 = vmatprep.subr.mxu0 0.0
    %1692 = vmatpush1.msra.mxu0 %v1567
    %1693 = vmatprep.subr.mxu0 0.0
    %1694 = vmatpush1.msra.mxu0 %v1568
    %1695 = vmatprep.subr.mxu0 0.0
    %1696 = vmatpush1.msra.mxu0 %v1569
    %1697 = vmatprep.subr.mxu0 0.0
    %1698 = vmatpush1.msra.mxu0 %v1570
    %1699 = vmatprep.subr.mxu0 0.0
    %1700 = vmatpush1.msra.mxu0 %v1571
    %1701 = vmatprep.subr.mxu0 0.0
    %1702 = vmatpush1.msra.mxu0 %v1572
    %1703 = vmatprep.subr.mxu0 0.0
    %1704 = vmatpush1.msra.mxu0 %v1573
    %1705 = vmatprep.subr.mxu0 0.0
    %1706 = vmatpush1.msra.mxu0 %v1574
    %1707 = vmatprep.subr.mxu0 0.0
    %1708 = vmatpush1.msra.mxu0 %v1575
    %1709 = vmatprep.subr.mxu0 0.0
    %1710 = vmatpush1.msra.mxu0 %v1576
    %1711 = vmatprep.subr.mxu0 0.0
    %1712 = vmatpush1.msra.mxu0 %v1577
    %1713 = vmatprep.subr.mxu0 0.0
    %1714 = vmatpush1.msra.mxu0 %v1578
    %1715 = vmatprep.subr.mxu0 0.0
    %1716 = vmatpush1.msra.mxu0 %v1579
    %1717 = vmatprep.subr.mxu0 0.0
    %1718 = vmatpush1.msra.mxu0 %v1580
    %1719 = vmatprep.subr.mxu0 0.0
    %1720 = vmatpush1.msra.mxu0 %v1581
    %1721 = vmatprep.subr.mxu0 0.0
    %1722 = vmatpush1.msra.mxu0 %v1582
    %1723 = vmatprep.subr.mxu0 0.0
    %1724 = vmatpush1.msra.mxu0 %v1583
    %1725 = vmatprep.subr.mxu0 0.0
    %1726 = vmatpush1.msra.mxu0 %v1584
    %1727 = vmatprep.subr.mxu0 0.0
    %1728 = vmatpush1.msra.mxu0 %v1585
    %1729 = vmatprep.subr.mxu0 0.0
    %1730 = vmatpush1.msra.mxu0 %v1586
    %1731 = vmatprep.mubr.f32.mxu0 %v1457
    %1732 = vmatmul.mubr.f32.gmra.mrb[0].mxu0 %v1444
    %v1733 = vpop.f32.mrb[0].mxu0
    %v1734 = vadd.f32 %v1654, %v1733
    %v1735 = vpop.f32.mrb[0].mxu0
    %1736 = vmatprep.mubr.f32.mxu0 %v1456
    %1737 = vmatmul.mubr.f32.gmra.mrb[0].mxu0 %v1443
    %v1738 = vpop.f32.mrb[0].mxu0
    %v1739 = vadd.f32 %v1659, %v1738
    %v1740 = vpop.f32.mrb[0].mxu0
    %1741 = vmatprep.mubr.f32.mxu0 %v1455
    %1742 = vmatmul.mubr.f32.gmra.mrb[0].mxu0 %v1442
    %v1743 = vpop.f32.mrb[0].mxu0
    %v1744 = vadd.f32 %v1664, %v1743
    %v1745 = vpop.f32.mrb[0].mxu0
    %1746 = vdwg.mxu0
    %1747 = vmatprep.subr.mxu0 0.0
    %1748 = vmatpush1.msra.mxu0 %v1459
    %1749 = vmatprep.subr.mxu0 0.0
    %1750 = vmatpush1.msra.mxu0 %v1460
    %1751 = vmatprep.subr.mxu0 0.0
    %1752 = vmatpush1.msra.mxu0 %v1461
    %1753 = vmatprep.subr.mxu0 0.0
    %1754 = vmatpush1.msra.mxu0 %v1462
    %1755 = vmatprep.subr.mxu0 0.0
    %1756 = vmatpush1.msra.mxu0 %v1463
    %1757 = vmatprep.subr.mxu0 0.0
    %1758 = vmatpush1.msra.mxu0 %v1464
    %1759 = vmatprep.subr.mxu0 0.0
    %1760 = vmatpush1.msra.mxu0 %v1465
    %1761 = vmatprep.subr.mxu0 0.0
    %1762 = vmatpush1.msra.mxu0 %v1466
    %1763 = vmatprep.subr.mxu0 0.0
    %1764 = vmatpush1.msra.mxu0 %v1467
    %1765 = vmatprep.subr.mxu0 0.0
    %1766 = vmatpush1.msra.mxu0 %v1468
    %1767 = vmatprep.subr.mxu0 0.0
    %1768 = vmatpush1.msra.mxu0 %v1469
    %1769 = vmatprep.subr.mxu0 0.0
    %1770 = vmatpush1.msra.mxu0 %v1470
    %1771 = vmatprep.subr.mxu0 0.0
    %1772 = vmatpush1.msra.mxu0 %v1471
    %1773 = vmatprep.subr.mxu0 0.0
    %1774 = vmatpush1.msra.mxu0 %v1472
    %1775 = vmatprep.subr.mxu0 0.0
    %1776 = vmatpush1.msra.mxu0 %v1473
    %1777 = vmatprep.subr.mxu0 0.0
    %1778 = vmatpush1.msra.mxu0 %v1474
    %1779 = vmatprep.subr.mxu0 0.0
    %1780 = vmatpush1.msra.mxu0 %v1475
    %1781 = vmatprep.subr.mxu0 0.0
    %1782 = vmatpush1.msra.mxu0 %v1476
    %1783 = vmatprep.subr.mxu0 0.0
    %1784 = vmatpush1.msra.mxu0 %v1477
    %1785 = vmatprep.subr.mxu0 0.0
    %1786 = vmatpush1.msra.mxu0 %v1478
    %1787 = vmatprep.subr.mxu0 0.0
    %1788 = vmatpush1.msra.mxu0 %v1479
    %1789 = vmatprep.subr.mxu0 0.0
    %1790 = vmatpush1.msra.mxu0 %v1480
    %1791 = vmatprep.subr.mxu0 0.0
    %1792 = vmatpush1.msra.mxu0 %v1481
    %1793 = vmatprep.subr.mxu0 0.0
    %1794 = vmatpush1.msra.mxu0 %v1482
    %1795 = vmatprep.subr.mxu0 0.0
    %1796 = vmatpush1.msra.mxu0 %v1483
    %1797 = vmatprep.subr.mxu0 0.0
    %1798 = vmatpush1.msra.mxu0 %v1484
    %1799 = vmatprep.subr.mxu0 0.0
    %1800 = vmatpush1.msra.mxu0 %v1485
    %1801 = vmatprep.subr.mxu0 0.0
    %1802 = vmatpush1.msra.mxu0 %v1486
    %1803 = vmatprep.subr.mxu0 0.0
    %1804 = vmatpush1.msra.mxu0 %v1487
    %1805 = vmatprep.subr.mxu0 0.0
    %1806 = vmatpush1.msra.mxu0 %v1488
    %1807 = vmatprep.subr.mxu0 0.0
    %1808 = vmatpush1.msra.mxu0 %v1489
    %1809 = vmatprep.subr.mxu0 0.0
    %1810 = vmatpush1.msra.mxu0 %v1490
    %1811 = vmatprep.mubr.f32.mxu0 %v1432
    %1812 = vmatmul.mubr.f32.gmra.mrb[0].mxu0 %v1413
    %v1813 = vpop.f32.mrb[0].mxu0
    %v1814 = vadd.f32 %v1734, %v1813
    %v1815 = vpop.f32.mrb[0].mxu0
    %1816 = vmatprep.mubr.f32.mxu0 %v1431
    %1817 = vmatmul.mubr.f32.gmra.mrb[0].mxu0 %v1414
    %v1818 = vpop.f32.mrb[0].mxu0
    %v1819 = vadd.f32 %v1739, %v1818
    %v1820 = vpop.f32.mrb[0].mxu0
    %1821 = vmatprep.mubr.f32.mxu0 %v1430
    %1822 = vmatmul.mubr.f32.gmra.mrb[0].mxu0 %v1415
    %v1823 = vpop.f32.mrb[0].mxu0
    %v1824 = vadd.f32 %v1744, %v1823
    %v1825 = vpop.f32.mrb[0].mxu0
    %1826 = vdwg.mxu0
    %1827 = vmatprep.subr.mxu0 0.0
    %1828 = vmatpush1.msra.mxu0 %v1491
    %1829 = vmatprep.subr.mxu0 0.0
    %1830 = vmatpush1.msra.mxu0 %v1492
    %1831 = vmatprep.subr.mxu0 0.0
    %1832 = vmatpush1.msra.mxu0 %v1493
    %1833 = vmatprep.subr.mxu0 0.0
    %1834 = vmatpush1.msra.mxu0 %v1494
    %1835 = vmatprep.subr.mxu0 0.0
    %1836 = vmatpush1.msra.mxu0 %v1495
    %1837 = vmatprep.subr.mxu0 0.0
    %1838 = vmatpush1.msra.mxu0 %v1496
    %1839 = vmatprep.subr.mxu0 0.0
    %1840 = vmatpush1.msra.mxu0 %v1497
    %1841 = vmatprep.subr.mxu0 0.0
    %1842 = vmatpush1.msra.mxu0 %v1498
    %1843 = vmatprep.subr.mxu0 0.0
    %1844 = vmatpush1.msra.mxu0 %v1499
    %1845 = vmatprep.subr.mxu0 0.0
    %1846 = vmatpush1.msra.mxu0 %v1500
    %1847 = vmatprep.subr.mxu0 0.0
    %1848 = vmatpush1.msra.mxu0 %v1501
    %1849 = vmatprep.subr.mxu0 0.0
    %1850 = vmatpush1.msra.mxu0 %v1502
    %1851 = vmatprep.subr.mxu0 0.0
    %1852 = vmatpush1.msra.mxu0 %v1503
    %1853 = vmatprep.subr.mxu0 0.0
    %1854 = vmatpush1.msra.mxu0 %v1504
    %1855 = vmatprep.subr.mxu0 0.0
    %1856 = vmatpush1.msra.mxu0 %v1505
    %1857 = vmatprep.subr.mxu0 0.0
    %1858 = vmatpush1.msra.mxu0 %v1506
    %1859 = vmatprep.subr.mxu0 0.0
    %1860 = vmatpush1.msra.mxu0 %v1507
    %1861 = vmatprep.subr.mxu0 0.0
    %1862 = vmatpush1.msra.mxu0 %v1508
    %1863 = vmatprep.subr.mxu0 0.0
    %1864 = vmatpush1.msra.mxu0 %v1509
    %1865 = vmatprep.subr.mxu0 0.0
    %1866 = vmatpush1.msra.mxu0 %v1510
    %1867 = vmatprep.subr.mxu0 0.0
    %1868 = vmatpush1.msra.mxu0 %v1511
    %1869 = vmatprep.subr.mxu0 0.0
    %1870 = vmatpush1.msra.mxu0 %v1512
    %1871 = vmatprep.subr.mxu0 0.0
    %1872 = vmatpush1.msra.mxu0 %v1513
    %1873 = vmatprep.subr.mxu0 0.0
    %1874 = vmatpush1.msra.mxu0 %v1514
    %1875 = vmatprep.subr.mxu0 0.0
    %1876 = vmatpush1.msra.mxu0 %v1515
    %1877 = vmatprep.subr.mxu0 0.0
    %1878 = vmatpush1.msra.mxu0 %v1516
    %1879 = vmatprep.subr.mxu0 0.0
    %1880 = vmatpush1.msra.mxu0 %v1517
    %1881 = vmatprep.subr.mxu0 0.0
    %1882 = vmatpush1.msra.mxu0 %v1518
    %1883 = vmatprep.subr.mxu0 0.0
    %1884 = vmatpush1.msra.mxu0 %v1519
    %1885 = vmatprep.subr.mxu0 0.0
    %1886 = vmatpush1.msra.mxu0 %v1520
    %1887 = vmatprep.subr.mxu0 0.0
    %1888 = vmatpush1.msra.mxu0 %v1521
    %1889 = vmatprep.subr.mxu0 0.0
    %1890 = vmatpush1.msra.mxu0 %v1522
    %1891 = vmatprep.mubr.f32.mxu0 %v1458
    %1892 = vmatmul.mubr.f32.gmra.mrb[0].mxu0 %v1445
    %v1893 = vpop.f32.mrb[0].mxu0
    %v1894 = vadd.f32 %v1814, %v1893
    %v1895 = vpop.f32.mrb[0].mxu0
    %1896 = vmatprep.mubr.f32.mxu0 %v1457
    %1897 = vmatmul.mubr.f32.gmra.mrb[0].mxu0 %v1444
    %v1898 = vpop.f32.mrb[0].mxu0
    %v1899 = vadd.f32 %v1819, %v1898
    %v1900 = vpop.f32.mrb[0].mxu0
    %1901 = vmatprep.mubr.f32.mxu0 %v1456
    %1902 = vmatmul.mubr.f32.gmra.mrb[0].mxu0 %v1443
    %v1903 = vpop.f32.mrb[0].mxu0
    %v1904 = vadd.f32 %v1824, %v1903
    %v1905 = vpop.f32.mrb[0].mxu0
    %1906 = vdwg.mxu0
    %v1907 = vld [vmem:[%s3 + $0x400] sm:$0xff]
    %v1908 = vld [vmem:[%s3 + $0x408] sm:$0xff]
    %v1909 = vld [vmem:[%s3 + $0x410] sm:$0xff]
    %v1910 = vld [vmem:[%s3 + $0x418] sm:$0xff]
    %v1911 = vld [vmem:[%s3 + $0x420] sm:$0xff]
    %v1912 = vld [vmem:[%s3 + $0x428] sm:$0xff]
    %v1913 = vld [vmem:[%s3 + $0x430] sm:$0xff]
    %v1914 = vld [vmem:[%s3 + $0x438] sm:$0xff]
    %v1915 = vld [vmem:[%s3 + $0x440] sm:$0xff]
    %v1916 = vld [vmem:[%s3 + $0x448] sm:$0xff]
    %v1917 = vld [vmem:[%s3 + $0x450] sm:$0xff]
    %v1918 = vld [vmem:[%s3 + $0x458] sm:$0xff]
    %v1919 = vld [vmem:[%s3 + $0x460] sm:$0xff]
    %v1920 = vld [vmem:[%s3 + $0x468] sm:$0xff]
    %v1921 = vld [vmem:[%s3 + $0x470] sm:$0xff]
    %v1922 = vld [vmem:[%s3 + $0x478] sm:$0xff]
    %v1923 = vld [vmem:[%s3 + $0x480] sm:$0xff]
    %v1924 = vld [vmem:[%s3 + $0x488] sm:$0xff]
    %v1925 = vld [vmem:[%s3 + $0x490] sm:$0xff]
    %v1926 = vld [vmem:[%s3 + $0x498] sm:$0xff]
    %v1927 = vld [vmem:[%s3 + $0x4a0] sm:$0xff]
    %v1928 = vld [vmem:[%s3 + $0x4a8] sm:$0xff]
    %v1929 = vld [vmem:[%s3 + $0x4b0] sm:$0xff]
    %v1930 = vld [vmem:[%s3 + $0x4b8] sm:$0xff]
    %v1931 = vld [vmem:[%s3 + $0x4c0] sm:$0xff]
    %v1932 = vld [vmem:[%s3 + $0x4c8] sm:$0xff]
    %v1933 = vld [vmem:[%s3 + $0x4d0] sm:$0xff]
    %v1934 = vld [vmem:[%s3 + $0x4d8] sm:$0xff]
    %v1935 = vld [vmem:[%s3 + $0x4e0] sm:$0xff]
    %v1936 = vld [vmem:[%s3 + $0x4e8] sm:$0xff]
    %v1937 = vld [vmem:[%s3 + $0x4f0] sm:$0xff]
    %v1938 = vld [vmem:[%s3 + $0x4f8] sm:$0xff]
    %v1939 = vld [vmem:[%s3 + $0x500] sm:$0xff]
    %v1940 = vld [vmem:[%s3 + $0x508] sm:$0xff]
    %v1941 = vld [vmem:[%s3 + $0x510] sm:$0xff]
    %v1942 = vld [vmem:[%s3 + $0x518] sm:$0xff]
    %v1943 = vld [vmem:[%s3 + $0x520] sm:$0xff]
    %v1944 = vld [vmem:[%s3 + $0x528] sm:$0xff]
    %v1945 = vld [vmem:[%s3 + $0x530] sm:$0xff]
    %v1946 = vld [vmem:[%s3 + $0x538] sm:$0xff]
    %v1947 = vld [vmem:[%s3 + $0x540] sm:$0xff]
    %v1948 = vld [vmem:[%s3 + $0x548] sm:$0xff]
    %v1949 = vld [vmem:[%s3 + $0x550] sm:$0xff]
    %v1950 = vld [vmem:[%s3 + $0x558] sm:$0xff]
    %v1951 = vld [vmem:[%s3 + $0x560] sm:$0xff]
    %v1952 = vld [vmem:[%s3 + $0x568] sm:$0xff]
    %v1953 = vld [vmem:[%s3 + $0x570] sm:$0xff]
    %v1954 = vld [vmem:[%s3 + $0x578] sm:$0xff]
    %v1955 = vld [vmem:[%s3 + $0x580] sm:$0xff]
    %v1956 = vld [vmem:[%s3 + $0x588] sm:$0xff]
    %v1957 = vld [vmem:[%s3 + $0x590] sm:$0xff]
    %v1958 = vld [vmem:[%s3 + $0x598] sm:$0xff]
    %v1959 = vld [vmem:[%s3 + $0x5a0] sm:$0xff]
    %v1960 = vld [vmem:[%s3 + $0x5a8] sm:$0xff]
    %v1961 = vld [vmem:[%s3 + $0x5b0] sm:$0xff]
    %v1962 = vld [vmem:[%s3 + $0x5b8] sm:$0xff]
    %v1963 = vld [vmem:[%s3 + $0x5c0] sm:$0xff]
    %v1964 = vld [vmem:[%s3 + $0x5c8] sm:$0xff]
    %v1965 = vld [vmem:[%s3 + $0x5d0] sm:$0xff]
    %v1966 = vld [vmem:[%s3 + $0x5d8] sm:$0xff]
    %v1967 = vld [vmem:[%s3 + $0x5e0] sm:$0xff]
    %v1968 = vld [vmem:[%s3 + $0x5e8] sm:$0xff]
    %v1969 = vld [vmem:[%s3 + $0x5f0] sm:$0xff]
    %v1970 = vld [vmem:[%s3 + $0x5f8] sm:$0xff]
    %1971 = vmatprep.subr.mxu0 0.0
    %1972 = vmatpush1.msra.mxu0 %v1907
    %1973 = vmatprep.subr.mxu0 0.0
    %1974 = vmatpush1.msra.mxu0 %v1908
    %1975 = vmatprep.subr.mxu0 0.0
    %1976 = vmatpush1.msra.mxu0 %v1909
    %1977 = vmatprep.subr.mxu0 0.0
    %1978 = vmatpush1.msra.mxu0 %v1910
    %1979 = vmatprep.subr.mxu0 0.0
    %1980 = vmatpush1.msra.mxu0 %v1911
    %1981 = vmatprep.subr.mxu0 0.0
    %1982 = vmatpush1.msra.mxu0 %v1912
    %1983 = vmatprep.subr.mxu0 0.0
    %1984 = vmatpush1.msra.mxu0 %v1913
    %1985 = vmatprep.subr.mxu0 0.0
    %1986 = vmatpush1.msra.mxu0 %v1914
    %1987 = vmatprep.subr.mxu0 0.0
    %1988 = vmatpush1.msra.mxu0 %v1915
    %1989 = vmatprep.subr.mxu0 0.0
    %1990 = vmatpush1.msra.mxu0 %v1916
    %1991 = vmatprep.subr.mxu0 0.0
    %1992 = vmatpush1.msra.mxu0 %v1917
    %1993 = vmatprep.subr.mxu0 0.0
    %1994 = vmatpush1.msra.mxu0 %v1918
    %1995 = vmatprep.subr.mxu0 0.0
    %1996 = vmatpush1.msra.mxu0 %v1919
    %1997 = vmatprep.subr.mxu0 0.0
    %1998 = vmatpush1.msra.mxu0 %v1920
    %1999 = vmatprep.subr.mxu0 0.0
    %2000 = vmatpush1.msra.mxu0 %v1921
    %2001 = vmatprep.subr.mxu0 0.0
    %2002 = vmatpush1.msra.mxu0 %v1922
    %2003 = vmatprep.subr.mxu0 0.0
    %2004 = vmatpush1.msra.mxu0 %v1923
    %2005 = vmatprep.subr.mxu0 0.0
    %2006 = vmatpush1.msra.mxu0 %v1924
    %2007 = vmatprep.subr.mxu0 0.0
    %2008 = vmatpush1.msra.mxu0 %v1925
    %2009 = vmatprep.subr.mxu0 0.0
    %2010 = vmatpush1.msra.mxu0 %v1926
    %2011 = vmatprep.subr.mxu0 0.0
    %2012 = vmatpush1.msra.mxu0 %v1927
    %2013 = vmatprep.subr.mxu0 0.0
    %2014 = vmatpush1.msra.mxu0 %v1928
    %2015 = vmatprep.subr.mxu0 0.0
    %2016 = vmatpush1.msra.mxu0 %v1929
    %2017 = vmatprep.subr.mxu0 0.0
    %2018 = vmatpush1.msra.mxu0 %v1930
    %2019 = vmatprep.subr.mxu0 0.0
    %2020 = vmatpush1.msra.mxu0 %v1931
    %2021 = vmatprep.subr.mxu0 0.0
    %2022 = vmatpush1.msra.mxu0 %v1932
    %2023 = vmatprep.subr.mxu0 0.0
    %2024 = vmatpush1.msra.mxu0 %v1933
    %2025 = vmatprep.subr.mxu0 0.0
    %2026 = vmatpush1.msra.mxu0 %v1934
    %2027 = vmatprep.subr.mxu0 0.0
    %2028 = vmatpush1.msra.mxu0 %v1935
    %2029 = vmatprep.subr.mxu0 0.0
    %2030 = vmatpush1.msra.mxu0 %v1936
    %2031 = vmatprep.subr.mxu0 0.0
    %2032 = vmatpush1.msra.mxu0 %v1937
    %2033 = vmatprep.subr.mxu0 0.0
    %2034 = vmatpush1.msra.mxu0 %v1938
    %2035 = vmatprep.mubr.f32.mxu0 %v1430
    %2036 = vmatmul.mubr.f32.gmra.mrb[0].mxu0 %v1415
    %v2037 = vpop.f32.mrb[0].mxu0
    %v2038 = vadd.f32 0.0, %v2037
    %v2039 = vpop.f32.mrb[0].mxu0
    %2040 = vmatprep.mubr.f32.mxu0 %v1429
    %2041 = vmatmul.mubr.f32.gmra.mrb[0].mxu0 %v1416
    %v2042 = vpop.f32.mrb[0].mxu0
    %v2043 = vadd.f32 0.0, %v2042
    %v2044 = vpop.f32.mrb[0].mxu0
    %2045 = vmatprep.mubr.f32.mxu0 %v1428
    %2046 = vmatmul.mubr.f32.gmra.mrb[0].mxu0 %v1417
    %v2047 = vpop.f32.mrb[0].mxu0
    %v2048 = vadd.f32 0.0, %v2047
    %v2049 = vpop.f32.mrb[0].mxu0
    %2050 = vdwg.mxu0
    %2051 = vmatprep.subr.mxu0 0.0
    %2052 = vmatpush1.msra.mxu0 %v1939
    %2053 = vmatprep.subr.mxu0 0.0
    %2054 = vmatpush1.msra.mxu0 %v1940
    %2055 = vmatprep.subr.mxu0 0.0
    %2056 = vmatpush1.msra.mxu0 %v1941
    %2057 = vmatprep.subr.mxu0 0.0
    %2058 = vmatpush1.msra.mxu0 %v1942
    %2059 = vmatprep.subr.mxu0 0.0
    %2060 = vmatpush1.msra.mxu0 %v1943
    %2061 = vmatprep.subr.mxu0 0.0
    %2062 = vmatpush1.msra.mxu0 %v1944
    %2063 = vmatprep.subr.mxu0 0.0
    %2064 = vmatpush1.msra.mxu0 %v1945
    %2065 = vmatprep.subr.mxu0 0.0
    %2066 = vmatpush1.msra.mxu0 %v1946
    %2067 = vmatprep.subr.mxu0 0.0
    %2068 = vmatpush1.msra.mxu0 %v1947
    %2069 = vmatprep.subr.mxu0 0.0
    %2070 = vmatpush1.msra.mxu0 %v1948
    %2071 = vmatprep.subr.mxu0 0.0
    %2072 = vmatpush1.msra.mxu0 %v1949
    %2073 = vmatprep.subr.mxu0 0.0
    %2074 = vmatpush1.msra.mxu0 %v1950
    %2075 = vmatprep.subr.mxu0 0.0
    %2076 = vmatpush1.msra.mxu0 %v1951
    %2077 = vmatprep.subr.mxu0 0.0
    %2078 = vmatpush1.msra.mxu0 %v1952
    %2079 = vmatprep.subr.mxu0 0.0
    %2080 = vmatpush1.msra.mxu0 %v1953
    %2081 = vmatprep.subr.mxu0 0.0
    %2082 = vmatpush1.msra.mxu0 %v1954
    %2083 = vmatprep.subr.mxu0 0.0
    %2084 = vmatpush1.msra.mxu0 %v1955
    %2085 = vmatprep.subr.mxu0 0.0
    %2086 = vmatpush1.msra.mxu0 %v1956
    %2087 = vmatprep.subr.mxu0 0.0
    %2088 = vmatpush1.msra.mxu0 %v1957
    %2089 = vmatprep.subr.mxu0 0.0
    %2090 = vmatpush1.msra.mxu0 %v1958
    %2091 = vmatprep.subr.mxu0 0.0
    %2092 = vmatpush1.msra.mxu0 %v1959
    %2093 = vmatprep.subr.mxu0 0.0
    %2094 = vmatpush1.msra.mxu0 %v1960
    %2095 = vmatprep.subr.mxu0 0.0
    %2096 = vmatpush1.msra.mxu0 %v1961
    %2097 = vmatprep.subr.mxu0 0.0
    %2098 = vmatpush1.msra.mxu0 %v1962
    %2099 = vmatprep.subr.mxu0 0.0
    %2100 = vmatpush1.msra.mxu0 %v1963
    %2101 = vmatprep.subr.mxu0 0.0
    %2102 = vmatpush1.msra.mxu0 %v1964
    %2103 = vmatprep.subr.mxu0 0.0
    %2104 = vmatpush1.msra.mxu0 %v1965
    %2105 = vmatprep.subr.mxu0 0.0
    %2106 = vmatpush1.msra.mxu0 %v1966
    %2107 = vmatprep.subr.mxu0 0.0
    %2108 = vmatpush1.msra.mxu0 %v1967
    %2109 = vmatprep.subr.mxu0 0.0
    %2110 = vmatpush1.msra.mxu0 %v1968
    %2111 = vmatprep.subr.mxu0 0.0
    %2112 = vmatpush1.msra.mxu0 %v1969
    %2113 = vmatprep.subr.mxu0 0.0
    %2114 = vmatpush1.msra.mxu0 %v1970
    %2115 = vmatprep.mubr.f32.mxu0 %v1456
    %2116 = vmatmul.mubr.f32.gmra.mrb[0].mxu0 %v1443
    %v2117 = vpop.f32.mrb[0].mxu0
    %v2118 = vadd.f32 %v2038, %v2117
    %v2119 = vpop.f32.mrb[0].mxu0
    %2120 = vmatprep.mubr.f32.mxu0 %v1455
    %2121 = vmatmul.mubr.f32.gmra.mrb[0].mxu0 %v1442
    %v2122 = vpop.f32.mrb[0].mxu0
    %v2123 = vadd.f32 %v2043, %v2122
    %v2124 = vpop.f32.mrb[0].mxu0
    %2125 = vmatprep.mubr.f32.mxu0 %v1454
    %2126 = vmatmul.mubr.f32.gmra.mrb[0].mxu0 %v1441
    %v2127 = vpop.f32.mrb[0].mxu0
    %v2128 = vadd.f32 %v2048, %v2127
    %v2129 = vpop.f32.mrb[0].mxu0
    %2130 = vdwg.mxu0
    %v2131 = vadd.f32 %v1894, %v2118
    %v2132 = vadd.f32 %v1899, %v2123
    %v2133 = vadd.f32 %v1904, %v2128
    %v2134 = vld [vmem:[%s3 + $0x600] sm:$0xff]
    %v2135 = vld [vmem:[%s3 + $0x608] sm:$0xff]
    %v2136 = vld [vmem:[%s3 + $0x610] sm:$0xff]
    %v2137 = vld [vmem:[%s3 + $0x618] sm:$0xff]
    %v2138 = vld [vmem:[%s3 + $0x620] sm:$0xff]
    %v2139 = vld [vmem:[%s3 + $0x628] sm:$0xff]
    %v2140 = vld [vmem:[%s3 + $0x630] sm:$0xff]
    %v2141 = vld [vmem:[%s3 + $0x638] sm:$0xff]
    %v2142 = vld [vmem:[%s3 + $0x640] sm:$0xff]
    %v2143 = vld [vmem:[%s3 + $0x648] sm:$0xff]
    %v2144 = vld [vmem:[%s3 + $0x650] sm:$0xff]
    %v2145 = vld [vmem:[%s3 + $0x658] sm:$0xff]
    %v2146 = vld [vmem:[%s3 + $0x660] sm:$0xff]
    %v2147 = vld [vmem:[%s3 + $0x668] sm:$0xff]
    %v2148 = vld [vmem:[%s3 + $0x670] sm:$0xff]
    %v2149 = vld [vmem:[%s3 + $0x678] sm:$0xff]
    %v2150 = vld [vmem:[%s3 + $0x680] sm:$0xff]
    %v2151 = vld [vmem:[%s3 + $0x688] sm:$0xff]
    %v2152 = vld [vmem:[%s3 + $0x690] sm:$0xff]
    %v2153 = vld [vmem:[%s3 + $0x698] sm:$0xff]
    %v2154 = vld [vmem:[%s3 + $0x6a0] sm:$0xff]
    %v2155 = vld [vmem:[%s3 + $0x6a8] sm:$0xff]
    %v2156 = vld [vmem:[%s3 + $0x6b0] sm:$0xff]
    %v2157 = vld [vmem:[%s3 + $0x6b8] sm:$0xff]
    %v2158 = vld [vmem:[%s3 + $0x6c0] sm:$0xff]
    %v2159 = vld [vmem:[%s3 + $0x6c8] sm:$0xff]
    %v2160 = vld [vmem:[%s3 + $0x6d0] sm:$0xff]
    %v2161 = vld [vmem:[%s3 + $0x6d8] sm:$0xff]
    %v2162 = vld [vmem:[%s3 + $0x6e0] sm:$0xff]
    %v2163 = vld [vmem:[%s3 + $0x6e8] sm:$0xff]
    %v2164 = vld [vmem:[%s3 + $0x6f0] sm:$0xff]
    %v2165 = vld [vmem:[%s3 + $0x6f8] sm:$0xff]
    %v2166 = vld [vmem:[%s3 + $0x700] sm:$0xff]
    %v2167 = vld [vmem:[%s3 + $0x708] sm:$0xff]
    %v2168 = vld [vmem:[%s3 + $0x710] sm:$0xff]
    %v2169 = vld [vmem:[%s3 + $0x718] sm:$0xff]
    %v2170 = vld [vmem:[%s3 + $0x720] sm:$0xff]
    %v2171 = vld [vmem:[%s3 + $0x728] sm:$0xff]
    %v2172 = vld [vmem:[%s3 + $0x730] sm:$0xff]
    %v2173 = vld [vmem:[%s3 + $0x738] sm:$0xff]
    %v2174 = vld [vmem:[%s3 + $0x740] sm:$0xff]
    %v2175 = vld [vmem:[%s3 + $0x748] sm:$0xff]
    %v2176 = vld [vmem:[%s3 + $0x750] sm:$0xff]
    %v2177 = vld [vmem:[%s3 + $0x758] sm:$0xff]
    %v2178 = vld [vmem:[%s3 + $0x760] sm:$0xff]
    %v2179 = vld [vmem:[%s3 + $0x768] sm:$0xff]
    %v2180 = vld [vmem:[%s3 + $0x770] sm:$0xff]
    %v2181 = vld [vmem:[%s3 + $0x778] sm:$0xff]
    %v2182 = vld [vmem:[%s3 + $0x780] sm:$0xff]
    %v2183 = vld [vmem:[%s3 + $0x788] sm:$0xff]
    %v2184 = vld [vmem:[%s3 + $0x790] sm:$0xff]
    %v2185 = vld [vmem:[%s3 + $0x798] sm:$0xff]
    %v2186 = vld [vmem:[%s3 + $0x7a0] sm:$0xff]
    %v2187 = vld [vmem:[%s3 + $0x7a8] sm:$0xff]
    %v2188 = vld [vmem:[%s3 + $0x7b0] sm:$0xff]
    %v2189 = vld [vmem:[%s3 + $0x7b8] sm:$0xff]
    %v2190 = vld [vmem:[%s3 + $0x7c0] sm:$0xff]
    %v2191 = vld [vmem:[%s3 + $0x7c8] sm:$0xff]
    %v2192 = vld [vmem:[%s3 + $0x7d0] sm:$0xff]
    %v2193 = vld [vmem:[%s3 + $0x7d8] sm:$0xff]
    %v2194 = vld [vmem:[%s3 + $0x7e0] sm:$0xff]
    %v2195 = vld [vmem:[%s3 + $0x7e8] sm:$0xff]
    %v2196 = vld [vmem:[%s3 + $0x7f0] sm:$0xff]
    %v2197 = vld [vmem:[%s3 + $0x7f8] sm:$0xff]
    %2198 = vmatprep.subr.mxu0 0.0
    %2199 = vmatpush1.msra.mxu0 %v2134
    %2200 = vmatprep.subr.mxu0 0.0
    %2201 = vmatpush1.msra.mxu0 %v2135
    %2202 = vmatprep.subr.mxu0 0.0
    %2203 = vmatpush1.msra.mxu0 %v2136
    %2204 = vmatprep.subr.mxu0 0.0
    %2205 = vmatpush1.msra.mxu0 %v2137
    %2206 = vmatprep.subr.mxu0 0.0
    %2207 = vmatpush1.msra.mxu0 %v2138
    %2208 = vmatprep.subr.mxu0 0.0
    %2209 = vmatpush1.msra.mxu0 %v2139
    %2210 = vmatprep.subr.mxu0 0.0
    %2211 = vmatpush1.msra.mxu0 %v2140
    %2212 = vmatprep.subr.mxu0 0.0
    %2213 = vmatpush1.msra.mxu0 %v2141
    %2214 = vmatprep.subr.mxu0 0.0
    %2215 = vmatpush1.msra.mxu0 %v2142
    %2216 = vmatprep.subr.mxu0 0.0
    %2217 = vmatpush1.msra.mxu0 %v2143
    %2218 = vmatprep.subr.mxu0 0.0
    %2219 = vmatpush1.msra.mxu0 %v2144
    %2220 = vmatprep.subr.mxu0 0.0
    %2221 = vmatpush1.msra.mxu0 %v2145
    %2222 = vmatprep.subr.mxu0 0.0
    %2223 = vmatpush1.msra.mxu0 %v2146
    %2224 = vmatprep.subr.mxu0 0.0
    %2225 = vmatpush1.msra.mxu0 %v2147
    %2226 = vmatprep.subr.mxu0 0.0
    %2227 = vmatpush1.msra.mxu0 %v2148
    %2228 = vmatprep.subr.mxu0 0.0
    %2229 = vmatpush1.msra.mxu0 %v2149
    %2230 = vmatprep.subr.mxu0 0.0
    %2231 = vmatpush1.msra.mxu0 %v2150
    %2232 = vmatprep.subr.mxu0 0.0
    %2233 = vmatpush1.msra.mxu0 %v2151
    %2234 = vmatprep.subr.mxu0 0.0
    %2235 = vmatpush1.msra.mxu0 %v2152
    %2236 = vmatprep.subr.mxu0 0.0
    %2237 = vmatpush1.msra.mxu0 %v2153
    %2238 = vmatprep.subr.mxu0 0.0
    %2239 = vmatpush1.msra.mxu0 %v2154
    %2240 = vmatprep.subr.mxu0 0.0
    %2241 = vmatpush1.msra.mxu0 %v2155
    %2242 = vmatprep.subr.mxu0 0.0
    %2243 = vmatpush1.msra.mxu0 %v2156
    %2244 = vmatprep.subr.mxu0 0.0
    %2245 = vmatpush1.msra.mxu0 %v2157
    %2246 = vmatprep.subr.mxu0 0.0
    %2247 = vmatpush1.msra.mxu0 %v2158
    %2248 = vmatprep.subr.mxu0 0.0
    %2249 = vmatpush1.msra.mxu0 %v2159
    %2250 = vmatprep.subr.mxu0 0.0
    %2251 = vmatpush1.msra.mxu0 %v2160
    %2252 = vmatprep.subr.mxu0 0.0
    %2253 = vmatpush1.msra.mxu0 %v2161
    %2254 = vmatprep.subr.mxu0 0.0
    %2255 = vmatpush1.msra.mxu0 %v2162
    %2256 = vmatprep.subr.mxu0 0.0
    %2257 = vmatpush1.msra.mxu0 %v2163
    %2258 = vmatprep.subr.mxu0 0.0
    %2259 = vmatpush1.msra.mxu0 %v2164
    %2260 = vmatprep.subr.mxu0 0.0
    %2261 = vmatpush1.msra.mxu0 %v2165
    %2262 = vmatprep.mubr.f32.mxu0 %v1429
    %2263 = vmatmul.mubr.f32.gmra.mrb[0].mxu0 %v1416
    %v2264 = vpop.f32.mrb[0].mxu0
    %v2265 = vadd.f32 0.0, %v2264
    %v2266 = vpop.f32.mrb[0].mxu0
    %2267 = vmatprep.mubr.f32.mxu0 %v1428
    %2268 = vmatmul.mubr.f32.gmra.mrb[0].mxu0 %v1417
    %v2269 = vpop.f32.mrb[0].mxu0
    %v2270 = vadd.f32 0.0, %v2269
    %v2271 = vpop.f32.mrb[0].mxu0
    %2272 = vmatprep.mubr.f32.mxu0 %v1427
    %2273 = vmatmul.mubr.f32.gmra.mrb[0].mxu0 %v1418
    %v2274 = vpop.f32.mrb[0].mxu0
    %v2275 = vadd.f32 0.0, %v2274
    %v2276 = vpop.f32.mrb[0].mxu0
    %2277 = vdwg.mxu0
    %2278 = vmatprep.subr.mxu0 0.0
    %2279 = vmatpush1.msra.mxu0 %v2166
    %2280 = vmatprep.subr.mxu0 0.0
    %2281 = vmatpush1.msra.mxu0 %v2167
    %2282 = vmatprep.subr.mxu0 0.0
    %2283 = vmatpush1.msra.mxu0 %v2168
    %2284 = vmatprep.subr.mxu0 0.0
    %2285 = vmatpush1.msra.mxu0 %v2169
    %2286 = vmatprep.subr.mxu0 0.0
    %2287 = vmatpush1.msra.mxu0 %v2170
    %2288 = vmatprep.subr.mxu0 0.0
    %2289 = vmatpush1.msra.mxu0 %v2171
    %2290 = vmatprep.subr.mxu0 0.0
    %2291 = vmatpush1.msra.mxu0 %v2172
    %2292 = vmatprep.subr.mxu0 0.0
    %2293 = vmatpush1.msra.mxu0 %v2173
    %2294 = vmatprep.subr.mxu0 0.0
    %2295 = vmatpush1.msra.mxu0 %v2174
    %2296 = vmatprep.subr.mxu0 0.0
    %2297 = vmatpush1.msra.mxu0 %v2175
    %2298 = vmatprep.subr.mxu0 0.0
    %2299 = vmatpush1.msra.mxu0 %v2176
    %2300 = vmatprep.subr.mxu0 0.0
    %2301 = vmatpush1.msra.mxu0 %v2177
    %2302 = vmatprep.subr.mxu0 0.0
    %2303 = vmatpush1.msra.mxu0 %v2178
    %2304 = vmatprep.subr.mxu0 0.0
    %2305 = vmatpush1.msra.mxu0 %v2179
    %2306 = vmatprep.subr.mxu0 0.0
    %2307 = vmatpush1.msra.mxu0 %v2180
    %2308 = vmatprep.subr.mxu0 0.0
    %2309 = vmatpush1.msra.mxu0 %v2181
    %2310 = vmatprep.subr.mxu0 0.0
    %2311 = vmatpush1.msra.mxu0 %v2182
    %2312 = vmatprep.subr.mxu0 0.0
    %2313 = vmatpush1.msra.mxu0 %v2183
    %2314 = vmatprep.subr.mxu0 0.0
    %2315 = vmatpush1.msra.mxu0 %v2184
    %2316 = vmatprep.subr.mxu0 0.0
    %2317 = vmatpush1.msra.mxu0 %v2185
    %2318 = vmatprep.subr.mxu0 0.0
    %2319 = vmatpush1.msra.mxu0 %v2186
    %2320 = vmatprep.subr.mxu0 0.0
    %2321 = vmatpush1.msra.mxu0 %v2187
    %2322 = vmatprep.subr.mxu0 0.0
    %2323 = vmatpush1.msra.mxu0 %v2188
    %2324 = vmatprep.subr.mxu0 0.0
    %2325 = vmatpush1.msra.mxu0 %v2189
    %2326 = vmatprep.subr.mxu0 0.0
    %2327 = vmatpush1.msra.mxu0 %v2190
    %2328 = vmatprep.subr.mxu0 0.0
    %2329 = vmatpush1.msra.mxu0 %v2191
    %2330 = vmatprep.subr.mxu0 0.0
    %2331 = vmatpush1.msra.mxu0 %v2192
    %2332 = vmatprep.subr.mxu0 0.0
    %2333 = vmatpush1.msra.mxu0 %v2193
    %2334 = vmatprep.subr.mxu0 0.0
    %2335 = vmatpush1.msra.mxu0 %v2194
    %2336 = vmatprep.subr.mxu0 0.0
    %2337 = vmatpush1.msra.mxu0 %v2195
    %2338 = vmatprep.subr.mxu0 0.0
    %2339 = vmatpush1.msra.mxu0 %v2196
    %2340 = vmatprep.subr.mxu0 0.0
    %2341 = vmatpush1.msra.mxu0 %v2197
    %2342 = vmatprep.mubr.f32.mxu0 %v1455
    %2343 = vmatmul.mubr.f32.gmra.mrb[0].mxu0 %v1442
    %v2344 = vpop.f32.mrb[0].mxu0
    %v2345 = vadd.f32 %v2265, %v2344
    %v2346 = vpop.f32.mrb[0].mxu0
    %2347 = vmatprep.mubr.f32.mxu0 %v1454
    %2348 = vmatmul.mubr.f32.gmra.mrb[0].mxu0 %v1441
    %v2349 = vpop.f32.mrb[0].mxu0
    %v2350 = vadd.f32 %v2270, %v2349
    %v2351 = vpop.f32.mrb[0].mxu0
    %2352 = vmatprep.mubr.f32.mxu0 %v1453
    %2353 = vmatmul.mubr.f32.gmra.mrb[0].mxu0 %v1440
    %v2354 = vpop.f32.mrb[0].mxu0
    %v2355 = vadd.f32 %v2275, %v2354
    %v2356 = vpop.f32.mrb[0].mxu0
    %2357 = vdwg.mxu0
    %v2358 = vadd.f32 %v2131, %v2345
    %v2359 = vadd.f32 %v2132, %v2350
    %v2360 = vadd.f32 %v2133, %v2355
    %v2361 = vld [vmem:[%s4] sm:$0x1]
    %v2363 = vlaneseq
    %v2364 = vshrl.u32 %v2363, 7
    %v2365 = vsub.s32 0, %v2364
    %v2366 = vrot.slane %v2361, %v2365
    %v2368 = vadd.f32 %v2358, %v2366
    %v2369 = vadd.f32 %v2359, %v2366
    %v2370 = vadd.f32 %v2360, %v2366
    %vm2371 = vcmp.gt.f32.partialorder %v2368, 0.0
    %vm2372 = vcmp.gt.f32.partialorder %v2369, 0.0
    %vm2373 = vcmp.gt.f32.partialorder %v2370, 0.0
    %v2374 = vmul.f32 %v2368, 0.01
    %v2375 = vmul.f32 %v2369, 0.01
    %v2376 = vmul.f32 %v2370, 0.01
    %v2377 = vsel %vm2371, %v2368, %v2374
    %v2378 = vsel %vm2372, %v2369, %v2375
    %v2379 = vsel %vm2373, %v2370, %v2376
    %v2380 = vld [vmem:[%s5] sm:$0xff]
    %v2381 = vld [vmem:[%s5 + $0x8] sm:$0xff]
    %v2383 = vsel %vm1287, %v2380, 0
    %v2386 = vsel %vm1287, %v2381, 0
    %2388 = vmatprep.subr.mxu0 0.0
    %2389 = vmatpush1.msra.mxu0 %v2377
    %2390 = vmatprep.subr.mxu0 0.0
    %2391 = vmatpush1.msra.mxu0 %v2378
    %2392 = vmatprep.subr.mxu0 0.0
    %2393 = vmatpush1.msra.mxu0 %v2379
    %2394 = vmatprep.subr.mxu0 0.0
    %2395 = vmatpush1.msra.mxu0 0.0
    %2396 = vmatprep.subr.mxu0 0.0
    %2397 = vmatpush1.msra.mxu0 0.0
    %2398 = vmatprep.subr.mxu0 0.0
    %2399 = vmatpush1.msra.mxu0 0.0
    %2400 = vmatprep.subr.mxu0 0.0
    %2401 = vmatpush1.msra.mxu0 0.0
    %2402 = vmatprep.subr.mxu0 0.0
    %2403 = vmatpush1.msra.mxu0 0.0
    %2404 = vmatprep.subr.mxu0 0.0
    %2405 = vmatpush1.msra.mxu0 0.0
    %2406 = vmatprep.subr.mxu0 0.0
    %2407 = vmatpush1.msra.mxu0 0.0
    %2408 = vmatprep.subr.mxu0 0.0
    %2409 = vmatpush1.msra.mxu0 0.0
    %2410 = vmatprep.subr.mxu0 0.0
    %2411 = vmatpush1.msra.mxu0 0.0
    %2412 = vmatprep.subr.mxu0 0.0
    %2413 = vmatpush1.msra.mxu0 0.0
    %2414 = vmatprep.subr.mxu0 0.0
    %2415 = vmatpush1.msra.mxu0 0.0
    %2416 = vmatprep.subr.mxu0 0.0
    %2417 = vmatpush1.msra.mxu0 0.0
    %2418 = vmatprep.subr.mxu0 0.0
    %2419 = vmatpush1.msra.mxu0 0.0
    %2420 = vmatprep.subr.mxu0 0.0
    %2421 = vmatpush1.msra.mxu0 0.0
    %2422 = vmatprep.subr.mxu0 0.0
    %2423 = vmatpush1.msra.mxu0 0.0
    %2424 = vmatprep.subr.mxu0 0.0
    %2425 = vmatpush1.msra.mxu0 0.0
    %2426 = vmatprep.subr.mxu0 0.0
    %2427 = vmatpush1.msra.mxu0 0.0
    %2428 = vmatprep.subr.mxu0 0.0
    %2429 = vmatpush1.msra.mxu0 0.0
    %2430 = vmatprep.subr.mxu0 0.0
    %2431 = vmatpush1.msra.mxu0 0.0
    %2432 = vmatprep.subr.mxu0 0.0
    %2433 = vmatpush1.msra.mxu0 0.0
    %2434 = vmatprep.subr.mxu0 0.0
    %2435 = vmatpush1.msra.mxu0 0.0
    %2436 = vmatprep.subr.mxu0 0.0
    %2437 = vmatpush1.msra.mxu0 0.0
    %2438 = vmatprep.subr.mxu0 0.0
    %2439 = vmatpush1.msra.mxu0 0.0
    %2440 = vmatprep.subr.mxu0 0.0
    %2441 = vmatpush1.msra.mxu0 0.0
    %2442 = vmatprep.subr.mxu0 0.0
    %2443 = vmatpush1.msra.mxu0 0.0
    %2444 = vmatprep.subr.mxu0 0.0
    %2445 = vmatpush1.msra.mxu0 0.0
    %2446 = vmatprep.subr.mxu0 0.0
    %2447 = vmatpush1.msra.mxu0 0.0
    %2448 = vmatprep.subr.mxu0 0.0
    %2449 = vmatpush1.msra.mxu0 0.0
    %2450 = vmatprep.subr.mxu0 0.0
    %2451 = vmatpush1.msra.mxu0 0.0
    %2452 = vmatprep.mubr.f32.mxu0 0.0
    %2453 = vmatmul.mubr.f32.gmra.mrb[0].mxu0 %v2383
    %v2454 = vpop.f32.mrb[0].mxu0
    %v2455 = vadd.f32 0.0, %v2454
    %v2456 = vpop.f32.mrb[0].mxu0
    %2457 = vmatprep.mubr.f32.mxu0 0.0
    %2458 = vmatmul.mubr.f32.gmra.mrb[0].mxu0 %v2386
    %v2459 = vpop.f32.mrb[0].mxu0
    %v2460 = vadd.f32 0.0, %v2459
    %v2461 = vpop.f32.mrb[0].mxu0
    %2462 = vdwg.mxu0
    %2463 = vst.msk [vmem:[#allocation2 + $0x10] sm:$0xff] %vm314, %v2455
    %2464 = vst.msk [vmem:[#allocation2 + $0x18] sm:$0xff] %vm314, %v2460
    // Predicated region
    $region26: #{tpu_custom_call.1} parent=1 // pred_check
      _
    $region27: #{tpu_custom_call.1} parent=1 // pred_check_branch
      %2466 = sbr.rel (0) target = $region29
    $region28: #{tpu_custom_call.1} parent=1 // pred_region
      %s2468 = ssub.s32 512, 512
      %2469 = vsyncadd [#allocation3], %s2468
      %s2470 = sshll.u32 [#allocation2], 4
      %s2471 = int_to_ptr.vmem [resolvable:$true] %s2470
      %2476 = dma.vmem_to_hbm [thread:$0]  %s2471, 512, %s6, [#allocation3], 128, 128, 8
    $region29: #{tpu_custom_call.1} parent=1 // pred_fallthru
      _
    // Predicated region
    $region30: #{tpu_custom_call.1} parent=1 // pred_check
      _
    $region31: #{tpu_custom_call.1} parent=1 // pred_check_branch
      %2478 = sbr.rel (0) target = $region33
    $region32: #{tpu_custom_call.1} parent=1 // pred_region
      %2479 = dma.done [#allocation3], 512
    $region33: #{tpu_custom_call.1} parent=1 // pred_fallthru
      _
    %2480 = vsyncpa [#allocation3], 1

</llo_original>
